<compile_context>
chip_gen: v6e
topology: v6e:2x2x1
jax: 0.10.0
libtpu: 0.0.40
codegen_flags: <defaults>
</compile_context>

<pallas_src>
import jax
import jax.numpy as jnp
from jax.experimental import pallas as pl
from jax.experimental.pallas import tpu as pltpu


# --------------------------------------------------------------------------
# Pallas kernels (single block; per-batch block-diagonal propagation; every
# wide matmul uses a static weight RHS; lane-dense outputs)
# --------------------------------------------------------------------------
def _layer1_kernel(x_ref, a1t_ref, a3t_ref, wlin_ref, w1k_ref, w3k_ref,
                   bias_ref, o_ref):
    """layer == 1:  H + H2 (two graph branches, fused).

    x_ref    : (B, N, C*L)   per-batch slabs, cols = (c, l)   -- dynamic
    a1t_ref  : (N, N)        A1^T                             -- cached
    a3t_ref  : (N, N)        A3^T                             -- cached
    wlin_ref : (C*L, C*Hd)   kron(I_C, W1 + W3)               -- cached
    w1k_ref  : (C*L, C*Hd)   kron(A1, W1)                     -- cached
    w3k_ref  : (C*L, C*Hd)   kron(A3, W3)                     -- cached
    bias_ref : (1, C*Hd)     tile(b1 + b3, C)                 -- cached
    o_ref    : (B, N, C*Hd)
    """
    nb = x_ref.shape[0]
    for b in range(nb):                      # B small & static -> unrolled
        xb = x_ref[b]                        # (N, C*L) slab, no relayout
        # block-diagonal row propagation: z = A^T @ x[b]  (tiny K = N dots)
        z1 = jnp.dot(a1t_ref[...], xb, preferred_element_type=jnp.float32)
        z3 = jnp.dot(a3t_ref[...], xb, preferred_element_type=jnp.float32)
        # reassociated form: static weight RHS consumes everything
        o_ref[b] = (
            jnp.dot(xb, wlin_ref[...], preferred_element_type=jnp.float32)
            + jnp.dot(z1, w1k_ref[...], preferred_element_type=jnp.float32)
            + jnp.dot(z3, w3k_ref[...], preferred_element_type=jnp.float32)
            + bias_ref[...])


def _layer2_kernel(x_ref, at_ref, akl_ref, wlin_ref, bias_ref, o_ref):
    """layer == 2:  single branch with the attention-fused adjacency.

    x_ref    : (B, N, C*L)                                     -- dynamic
    at_ref   : (N, N)       res_b^T                            -- dynamic, tiny
    akl_ref  : (C*L, C*L)   kron(res_b, I_L)                   -- dynamic, tiny
    wlin_ref : (C*L, C*Hd)  kron(I_C, W2)                      -- cached
    bias_ref : (1, C*Hd)    tile(b2, C)                        -- cached
    o_ref    : (B, N, C*Hd)
    """
    nb = x_ref.shape[0]
    for b in range(nb):
        xb = x_ref[b]
        z = jnp.dot(at_ref[...], xb, preferred_element_type=jnp.float32)
        zc = jnp.dot(z, akl_ref[...], preferred_element_type=jnp.float32)
        # kron(res_b, W2) == kron(res_b, I_L) @ kron(I_C, W2): one wide matmul
        # with the static cached weight RHS covers linear + propagation terms.
        o_ref[b] = (jnp.dot(xb + zc, wlin_ref[...],
                            preferred_element_type=jnp.float32)
                    + bias_ref[...])


# --------------------------------------------------------------------------
# pallas_call plumbing
# --------------------------------------------------------------------------
def _full_spec(shape):
    nd = len(shape)
    return pl.BlockSpec(shape, lambda i, _n=nd: (0,) * _n)


def _run_single_block(kernel, inputs, out_shape, flops):
    nbytes = sum(int(a.size) * a.dtype.itemsize for a in inputs)
    osz = 1
    for d in out_shape:
        osz *= int(d)
    nbytes += osz * 4
    return pl.pallas_call(
        kernel,
        out_shape=jax.ShapeDtypeStruct(out_shape, jnp.float32),
        # single block: at B*N <= 32 rows, per-step grid overhead dominates.
        # For larger row counts add a leading "parallel" row-chunk axis so
        # v7x's second TensorCore is used.
        grid=(1,),
        in_specs=[_full_spec(x.shape) for x in inputs],
        out_specs=_full_spec(out_shape),
        compiler_params=pltpu.CompilerParams(
            dimension_semantics=("arbitrary",)),
        cost_estimate=pl.CostEstimate(
            flops=int(flops), transcendentals=0, bytes_accessed=int(nbytes)),
    )(*inputs)


# --------------------------------------------------------------------------
# Static operand builders -- call ONCE per weight / adjacency update
# --------------------------------------------------------------------------
def make_layer1_operands(W1, A1, b1, W3, A3, b3, C):
    W1 = W1.astype(jnp.float32)
    W3 = W3.astype(jnp.float32)
    A1 = A1.astype(jnp.float32)
    A3 = A3.astype(jnp.float32)
    Hd = W1.shape[-1]
    eye_c = jnp.eye(C, dtype=jnp.float32)
    return dict(
        a1t=A1.T, a3t=A3.T,
        wlin=jnp.kron(eye_c, W1 + W3),                     # (C*L, C*Hd)
        w1k=jnp.kron(A1, W1),                              # (C*L, C*Hd)
        w3k=jnp.kron(A3, W3),                              # (C*L, C*Hd)
        bias=jnp.tile((b1 + b3).astype(jnp.float32), C).reshape(1, C * Hd))


def make_layer2_operands(W2, b2, C):
    W2 = W2.astype(jnp.float32)
    Hd = W2.shape[-1]
    eye_c = jnp.eye(C, dtype=jnp.float32)
    return dict(
        wlin=jnp.kron(eye_c, W2),                          # (C*L, C*Hd)
        bias=jnp.tile(b2.astype(jnp.float32), C).reshape(1, C * Hd))


# --------------------------------------------------------------------------
# Per-forward wrappers (free reshapes + kernel launch only)
# --------------------------------------------------------------------------
def odconv_layer1(X, ops):
    B, N, C, L = X.shape
    CH = ops["wlin"].shape[1]
    Hd = CH // C
    x3 = X.reshape(B, N, C * L).astype(jnp.float32)        # free, row-major
    inputs = (x3, ops["a1t"], ops["a3t"], ops["wlin"], ops["w1k"],
              ops["w3k"], ops["bias"])
    flops = B * (2 * 2 * N * N * (C * L) + 3 * 2 * N * (C * L) * CH)
    out3d = _run_single_block(_layer1_kernel, inputs, (B, N, CH), flops)
    return out3d.reshape(B, N, C, Hd)


def _graph_attention(G, G_add, attn_w, attn_b):
    """layer == 2 attention over the graph stack (tiny plain-JAX glue).

    Conv2d(1,1,(12,12)) on a 12x12 input == full-patch dot product -> (S,1,1,1).
    """
    attG = jnp.concatenate([G_add, G[None]], axis=0)       # (S, 3, 12, 12)
    btmp = jnp.split(attG, 3, axis=1)[1]                   # (S, 1, 12, 12)
    conv = jnp.sum(btmp * attn_w, axis=(1, 2, 3), keepdims=True) + attn_b
    b_attn = jax.nn.softmax(conv, axis=0)                  # (S, 1, 1, 1)
    return jnp.sum(btmp * b_attn, axis=0)[0]               # (12, 12)


def odconv_layer2(X, G, G_add, attn_w, attn_b, ops):
    res_b = _graph_attention(G, G_add, attn_w, attn_b)     # data-dependent
    B, N, C, L = X.shape
    CH = ops["wlin"].shape[1]
    Hd = CH // C
    x3 = X.reshape(B, N, C * L).astype(jnp.float32)
    at = res_b.T                                           # (N, N)
    # only this tiny (C*L, C*L) factor is data-dependent; weight kron cached
    akl = jnp.kron(res_b, jnp.eye(L, dtype=jnp.float32))
    inputs = (x3, at, akl, ops["wlin"], ops["bias"])
    flops = B * (2 * N * N * (C * L) + 2 * N * (C * L) * (C * L)
                 + 2 * N * (C * L) * CH)
    out3d = _run_single_block(_layer2_kernel, inputs, (B, N, CH), flops)
    return out3d.reshape(B, N, C, Hd)


# TODO(synk): layer == 0 branch requires dgl.graph construction + EGATConv
# (sparse graph attention) which has no clean Pallas equivalent; not implemented.


# --------------------------------------------------------------------------
# Pure-JAX reference (mirrors the torch einsums) and deterministic init
# --------------------------------------------------------------------------
def _ref_branch(X, W, A, b):
    y = jnp.einsum('bncl,lh->bnch', X, W)
    tmp = jnp.einsum('bnch,nm->bmch', y, A)
    prod = jnp.einsum('bmch,cd->bmdh', tmp, A)
    return y + prod + b


def _glorot(key, fan_in, fan_out, shape):
    a = (6.0 / (fan_in + fan_out)) ** 0.5
    return jax.random.uniform(key, shape, jnp.float32, -a, a)


# --------------------------------------------------------------------------
if __name__ == "__main__":
    key = jax.random.PRNGKey(0)
    ks = jax.random.split(key, 10)

    # ---------------- layer == 1 ----------------
    B, N, C, L, Hd = 2, 16, 16, 4, 32          # N == C (OD node count)
    X = jax.random.normal(ks[0], (B, N, C, L), jnp.float32)
    G_nor = jax.random.normal(ks[1], (1, 2, N, N), jnp.float32) * 0.1
    hyper = jax.random.normal(ks[2], (1, 2, N, N), jnp.float32) * 0.1
    W1 = _glorot(ks[3], L, Hd, (L, Hd))        # linear1, glorot, no bias
    W3 = _glorot(ks[4], L, Hd, (L, Hd))        # linear3
    b1 = jnp.zeros((Hd,), jnp.float32)         # zeros(self.b1)
    b3 = jnp.zeros((Hd,), jnp.float32)         # zeros(self.b3)
    A1 = jnp.squeeze(G_nor)[1]                 # G_nor.squeeze()[1]
    A3 = jnp.squeeze(hyper)[1]                 # hyper.squeeze()[1]

    ops1 = make_layer1_operands(W1, A1, b1, W3, A3, b3, C)   # built ONCE
    layer1 = jax.jit(odconv_layer1)
    out1 = layer1(X, ops1)
    jax.block_until_ready(out1)
    ref1 = _ref_branch(X, W1, A1, b1) + _ref_branch(X, W3, A3, b3)
    assert jnp.allclose(out1, ref1, rtol=1e-4, atol=1e-4), "layer1 mismatch"

    # ---------------- layer == 2 ----------------
    B2, N2, L2, H2 = 2, 12, 4, 32              # N2 == 12 forced by 12x12 conv
    X2 = jax.random.normal(ks[5], (B2, N2, N2, L2), jnp.float32)
    G = jax.random.normal(ks[6], (3, N2, N2), jnp.float32) * 0.1
    G_add = jax.random.normal(ks[7], (2, 3, N2, N2), jnp.float32) * 0.1
    W2 = _glorot(ks[8], L2, H2, (L2, H2))      # linear2, glorot, no bias
    b2 = jnp.zeros((H2,), jnp.float32)         # zeros(self.b2)
    attn_w = _glorot(ks[9], 144, 144, (1, 1, 12, 12))   # xavier_uniform_
    attn_b = jnp.zeros((1,), jnp.float32)      # attn2.bias.zero_()

    ops2 = make_layer2_operands(W2, b2, N2)                  # built ONCE
    layer2 = jax.jit(odconv_layer2)
    out2 = layer2(X2, G, G_add, attn_w, attn_b, ops2)
    jax.block_until_ready(out2)
    res_b_ref = _graph_attention(G, G_add, attn_w, attn_b)
    ref2 = _ref_branch(X2, W2, res_b_ref, b2)
    assert jnp.allclose(out2, ref2, rtol=1e-4, atol=1e-4), "layer2 mismatch"

    print("KERNEL_OK")
</pallas_src>

<mosaic_0001>
module attributes {stable_mosaic.version = 11 : i64} {
  func.func @_layer1_kernel(%arg0: i32, %arg1: memref<2x16x64xf32, #tpu.memory_space<vmem>>, %arg2: memref<16x16xf32, #tpu.memory_space<vmem>>, %arg3: memref<16x16xf32, #tpu.memory_space<vmem>>, %arg4: memref<64x512xf32, #tpu.memory_space<vmem>>, %arg5: memref<64x512xf32, #tpu.memory_space<vmem>>, %arg6: memref<64x512xf32, #tpu.memory_space<vmem>>, %arg7: memref<1x512xf32, #tpu.memory_space<vmem>>, %arg8: memref<2x16x512xf32, #tpu.memory_space<vmem>>) attributes {dimension_semantics = [#tpu.dimension_semantics<arbitrary>], iteration_bounds = array<i64: 1>, scalar_prefetch = 0 : i64, scratch_operands = 0 : i64, tpu.core_type = #tpu.core_type<tc>, window_params = [{pipeline_mode = #tpu.pipeline_mode<synchronous>, transform_indices = @transform_0, window_bounds = array<i64: 2, 16, 64>}, {pipeline_mode = #tpu.pipeline_mode<synchronous>, transform_indices = @transform_1, window_bounds = array<i64: 16, 16>}, {pipeline_mode = #tpu.pipeline_mode<synchronous>, transform_indices = @transform_2, window_bounds = array<i64: 16, 16>}, {pipeline_mode = #tpu.pipeline_mode<synchronous>, transform_indices = @transform_3, window_bounds = array<i64: 64, 512>}, {pipeline_mode = #tpu.pipeline_mode<synchronous>, transform_indices = @transform_4, window_bounds = array<i64: 64, 512>}, {pipeline_mode = #tpu.pipeline_mode<synchronous>, transform_indices = @transform_5, window_bounds = array<i64: 64, 512>}, {pipeline_mode = #tpu.pipeline_mode<synchronous>, transform_indices = @transform_6, window_bounds = array<i64: 1, 512>}, {pipeline_mode = #tpu.pipeline_mode<synchronous>, transform_indices = @transform_7, window_bounds = array<i64: 2, 16, 512>}]} {
    %c0 = arith.constant 0 : index
    %c0_0 = arith.constant 0 : index
    %c0_1 = arith.constant 0 : index
    %0 = vector.load %arg1[%c0, %c0_0, %c0_1] : memref<2x16x64xf32, #tpu.memory_space<vmem>>, vector<1x16x64xf32>
    %1 = vector.shape_cast %0 : vector<1x16x64xf32> to vector<16x64xf32>
    %c0_2 = arith.constant 0 : index
    %c0_3 = arith.constant 0 : index
    %2 = vector.load %arg2[%c0_2, %c0_3] : memref<16x16xf32, #tpu.memory_space<vmem>>, vector<16x16xf32>
    %cst = arith.constant dense<0.000000e+00> : vector<16x64xf32>
    %3 = tpu.matmul %2, %1, %cst {dimension_numbers = #tpu.dot_dimension_numbers<[1], [0], [0], [1], [0, 0, 1, 1], [], []>} : vector<16x16xf32>, vector<16x64xf32>, vector<16x64xf32> -> vector<16x64xf32>
    %c0_4 = arith.constant 0 : index
    %c0_5 = arith.constant 0 : index
    %4 = vector.load %arg3[%c0_4, %c0_5] : memref<16x16xf32, #tpu.memory_space<vmem>>, vector<16x16xf32>
    %cst_6 = arith.constant dense<0.000000e+00> : vector<16x64xf32>
    %5 = tpu.matmul %4, %1, %cst_6 {dimension_numbers = #tpu.dot_dimension_numbers<[1], [0], [0], [1], [0, 0, 1, 1], [], []>} : vector<16x16xf32>, vector<16x64xf32>, vector<16x64xf32> -> vector<16x64xf32>
    %c0_7 = arith.constant 0 : index
    %c0_8 = arith.constant 0 : index
    %6 = vector.load %arg4[%c0_7, %c0_8] : memref<64x512xf32, #tpu.memory_space<vmem>>, vector<64x512xf32>
    %cst_9 = arith.constant dense<0.000000e+00> : vector<16x512xf32>
    %7 = tpu.matmul %1, %6, %cst_9 {dimension_numbers = #tpu.dot_dimension_numbers<[1], [0], [0], [1], [0, 0, 1, 1], [], []>} : vector<16x64xf32>, vector<64x512xf32>, vector<16x512xf32> -> vector<16x512xf32>
    %c0_10 = arith.constant 0 : index
    %c0_11 = arith.constant 0 : index
    %8 = vector.load %arg5[%c0_10, %c0_11] : memref<64x512xf32, #tpu.memory_space<vmem>>, vector<64x512xf32>
    %cst_12 = arith.constant dense<0.000000e+00> : vector<16x512xf32>
    %9 = tpu.matmul %3, %8, %cst_12 {dimension_numbers = #tpu.dot_dimension_numbers<[1], [0], [0], [1], [0, 0, 1, 1], [], []>} : vector<16x64xf32>, vector<64x512xf32>, vector<16x512xf32> -> vector<16x512xf32>
    %10 = arith.addf %7, %9 : vector<16x512xf32>
    %c0_13 = arith.constant 0 : index
    %c0_14 = arith.constant 0 : index
    %11 = vector.load %arg6[%c0_13, %c0_14] : memref<64x512xf32, #tpu.memory_space<vmem>>, vector<64x512xf32>
    %cst_15 = arith.constant dense<0.000000e+00> : vector<16x512xf32>
    %12 = tpu.matmul %5, %11, %cst_15 {dimension_numbers = #tpu.dot_dimension_numbers<[1], [0], [0], [1], [0, 0, 1, 1], [], []>} : vector<16x64xf32>, vector<64x512xf32>, vector<16x512xf32> -> vector<16x512xf32>
    %13 = arith.addf %10, %12 : vector<16x512xf32>
    %c0_16 = arith.constant 0 : index
    %c0_17 = arith.constant 0 : index
    %14 = vector.load %arg7[%c0_16, %c0_17] : memref<1x512xf32, #tpu.memory_space<vmem>>, vector<1x512xf32>
    %15 = vector.broadcast %14 : vector<1x512xf32> to vector<16x512xf32>
    %16 = arith.addf %13, %15 : vector<16x512xf32>
    %c0_18 = arith.constant 0 : index
    %c0_19 = arith.constant 0 : index
    %c0_20 = arith.constant 0 : index
    %17 = vector.load %arg8[%c0_18, %c0_19, %c0_20] : memref<2x16x512xf32, #tpu.memory_space<vmem>>, vector<1x16x512xf32>
    %18 = vector.shape_cast %17 : vector<1x16x512xf32> to vector<16x512xf32>
    %19 = vector.shape_cast %16 : vector<16x512xf32> to vector<1x16x512xf32>
    tpu.vector_store %arg8[%c0_18, %c0_19, %c0_20], %19 {strides = array<i32>} : memref<2x16x512xf32, #tpu.memory_space<vmem>>, vector<1x16x512xf32>,
    %c1 = arith.constant 1 : index
    %c0_21 = arith.constant 0 : index
    %c0_22 = arith.constant 0 : index
    %20 = vector.load %arg1[%c1, %c0_21, %c0_22] : memref<2x16x64xf32, #tpu.memory_space<vmem>>, vector<1x16x64xf32>
    %21 = vector.shape_cast %20 : vector<1x16x64xf32> to vector<16x64xf32>
    %c0_23 = arith.constant 0 : index
    %c0_24 = arith.constant 0 : index
    %22 = vector.load %arg2[%c0_23, %c0_24] : memref<16x16xf32, #tpu.memory_space<vmem>>, vector<16x16xf32>
    %cst_25 = arith.constant dense<0.000000e+00> : vector<16x64xf32>
    %23 = tpu.matmul %22, %21, %cst_25 {dimension_numbers = #tpu.dot_dimension_numbers<[1], [0], [0], [1], [0, 0, 1, 1], [], []>} : vector<16x16xf32>, vector<16x64xf32>, vector<16x64xf32> -> vector<16x64xf32>
    %c0_26 = arith.constant 0 : index
    %c0_27 = arith.constant 0 : index
    %24 = vector.load %arg3[%c0_26, %c0_27] : memref<16x16xf32, #tpu.memory_space<vmem>>, vector<16x16xf32>
    %cst_28 = arith.constant dense<0.000000e+00> : vector<16x64xf32>
    %25 = tpu.matmul %24, %21, %cst_28 {dimension_numbers = #tpu.dot_dimension_numbers<[1], [0], [0], [1], [0, 0, 1, 1], [], []>} : vector<16x16xf32>, vector<16x64xf32>, vector<16x64xf32> -> vector<16x64xf32>
    %c0_29 = arith.constant 0 : index
    %c0_30 = arith.constant 0 : index
    %26 = vector.load %arg4[%c0_29, %c0_30] : memref<64x512xf32, #tpu.memory_space<vmem>>, vector<64x512xf32>
    %cst_31 = arith.constant dense<0.000000e+00> : vector<16x512xf32>
    %27 = tpu.matmul %21, %26, %cst_31 {dimension_numbers = #tpu.dot_dimension_numbers<[1], [0], [0], [1], [0, 0, 1, 1], [], []>} : vector<16x64xf32>, vector<64x512xf32>, vector<16x512xf32> -> vector<16x512xf32>
    %c0_32 = arith.constant 0 : index
    %c0_33 = arith.constant 0 : index
    %28 = vector.load %arg5[%c0_32, %c0_33] : memref<64x512xf32, #tpu.memory_space<vmem>>, vector<64x512xf32>
    %cst_34 = arith.constant dense<0.000000e+00> : vector<16x512xf32>
    %29 = tpu.matmul %23, %28, %cst_34 {dimension_numbers = #tpu.dot_dimension_numbers<[1], [0], [0], [1], [0, 0, 1, 1], [], []>} : vector<16x64xf32>, vector<64x512xf32>, vector<16x512xf32> -> vector<16x512xf32>
    %30 = arith.addf %27, %29 : vector<16x512xf32>
    %c0_35 = arith.constant 0 : index
    %c0_36 = arith.constant 0 : index
    %31 = vector.load %arg6[%c0_35, %c0_36] : memref<64x512xf32, #tpu.memory_space<vmem>>, vector<64x512xf32>
    %cst_37 = arith.constant dense<0.000000e+00> : vector<16x512xf32>
    %32 = tpu.matmul %25, %31, %cst_37 {dimension_numbers = #tpu.dot_dimension_numbers<[1], [0], [0], [1], [0, 0, 1, 1], [], []>} : vector<16x64xf32>, vector<64x512xf32>, vector<16x512xf32> -> vector<16x512xf32>
    %33 = arith.addf %30, %32 : vector<16x512xf32>
    %c0_38 = arith.constant 0 : index
    %c0_39 = arith.constant 0 : index
    %34 = vector.load %arg7[%c0_38, %c0_39] : memref<1x512xf32, #tpu.memory_space<vmem>>, vector<1x512xf32>
    %35 = vector.broadcast %34 : vector<1x512xf32> to vector<16x512xf32>
    %36 = arith.addf %33, %35 : vector<16x512xf32>
    %c1_40 = arith.constant 1 : index
    %c0_41 = arith.constant 0 : index
    %c0_42 = arith.constant 0 : index
    %37 = vector.load %arg8[%c1_40, %c0_41, %c0_42] : memref<2x16x512xf32, #tpu.memory_space<vmem>>, vector<1x16x512xf32>
    %38 = vector.shape_cast %37 : vector<1x16x512xf32> to vector<16x512xf32>
    %39 = vector.shape_cast %36 : vector<16x512xf32> to vector<1x16x512xf32>
    tpu.vector_store %arg8[%c1_40, %c0_41, %c0_42], %39 {strides = array<i32>} : memref<2x16x512xf32, #tpu.memory_space<vmem>>, vector<1x16x512xf32>,
    return
  }
  func.func @transform_0(%arg0: i32) -> (i32, i32, i32) {
    %c0_i32 = arith.constant 0 : i32
    %c0_i32_0 = arith.constant 0 : i32
    %c0_i32_1 = arith.constant 0 : i32
    %c0_i32_2 = arith.constant 0 : i32
    return %c0_i32, %c0_i32_0, %c0_i32_1 : i32, i32, i32
  }
  func.func @transform_1(%arg0: i32) -> (i32, i32) {
    %c0_i32 = arith.constant 0 : i32
    %c0_i32_0 = arith.constant 0 : i32
    %c0_i32_1 = arith.constant 0 : i32
    return %c0_i32, %c0_i32_0 : i32, i32
  }
  func.func @transform_2(%arg0: i32) -> (i32, i32) {
    %c0_i32 = arith.constant 0 : i32
    %c0_i32_0 = arith.constant 0 : i32
    %c0_i32_1 = arith.constant 0 : i32
    return %c0_i32, %c0_i32_0 : i32, i32
  }
  func.func @transform_3(%arg0: i32) -> (i32, i32) {
    %c0_i32 = arith.constant 0 : i32
    %c0_i32_0 = arith.constant 0 : i32
    %c0_i32_1 = arith.constant 0 : i32
    return %c0_i32, %c0_i32_0 : i32, i32
  }
  func.func @transform_4(%arg0: i32) -> (i32, i32) {
    %c0_i32 = arith.constant 0 : i32
    %c0_i32_0 = arith.constant 0 : i32
    %c0_i32_1 = arith.constant 0 : i32
    return %c0_i32, %c0_i32_0 : i32, i32
  }
  func.func @transform_5(%arg0: i32) -> (i32, i32) {
    %c0_i32 = arith.constant 0 : i32
    %c0_i32_0 = arith.constant 0 : i32
    %c0_i32_1 = arith.constant 0 : i32
    return %c0_i32, %c0_i32_0 : i32, i32
  }
  func.func @transform_6(%arg0: i32) -> (i32, i32) {
    %c0_i32 = arith.constant 0 : i32
    %c0_i32_0 = arith.constant 0 : i32
    %c0_i32_1 = arith.constant 0 : i32
    return %c0_i32, %c0_i32_0 : i32, i32
  }
  func.func @transform_7(%arg0: i32) -> (i32, i32, i32) {
    %c0_i32 = arith.constant 0 : i32
    %c0_i32_0 = arith.constant 0 : i32
    %c0_i32_1 = arith.constant 0 : i32
    %c0_i32_2 = arith.constant 0 : i32
    return %c0_i32, %c0_i32_0, %c0_i32_1 : i32, i32, i32
  }
}

</mosaic_0001>

<llo_original>
// kernel: odconv_layer1.1
$region0: #{odconv_layer1.1}
  #allocation0 [shape = 'u32[]', space=smem, size = 0x4, offset = 0x4, fixed_abs, tag = 'smem constant byte address 0x4 - core index']
  #allocation1 [shape = 'u32[144,128]{1,0:T(1,128)}', space=vmem, size = 0x12000, scoped, tag = 'internal scratch']
  %s0 = inlined_call_operand.vmem [shape: f32[2,16,64], index: 0, kind: input, shape index: {}]
  %s1 = inlined_call_operand.vmem [shape: f32[16,16], index: 1, kind: input, shape index: {}]
  %s2 = inlined_call_operand.vmem [shape: f32[16,16], index: 2, kind: input, shape index: {}]
  %s3 = inlined_call_operand.vmem [shape: f32[64,512], index: 3, kind: input, shape index: {}]
  %s4 = inlined_call_operand.hbm [shape: f32[64,512], index: 4, kind: input, shape index: {}]
  %s5 = inlined_call_operand.hbm [shape: f32[64,512], index: 5, kind: input, shape index: {}]
  %s6 = inlined_call_operand.vmem [shape: f32[1,512], index: 6, kind: input, shape index: {}]
  %s7 = inlined_call_operand.vmem [shape: f32[2,16,512], index: 7, kind: output, shape index: {}]
  %s8 = sld [smem:[#allocation0]]
  $region46: #{odconv_layer1.1} parent=0
    _
  %s10 = ssub.s32 1, %s8
  %s11 = scalar_select 0, %s10, %s8
  $region1: #{odconv_layer1.1} parent=0
    #allocation2 [shape = 'u8[131072]{0}', space=vmem, size = 0x20000, scoped, tag = 'input window, operand 4, single buffered']
    #allocation3 [shape = 's32[1]{0}', space=sflag, size = 0x4, scoped, tag = 'scoped memory for odconv_layer1.1']
    #allocation4 [shape = 'u8[131072]{0}', space=vmem, size = 0x20000, scoped, tag = 'input window, operand 5, single buffered']
    #allocation5 [shape = 's32[1]{0}', space=sflag, size = 0x4, scoped, tag = 'scoped memory for odconv_layer1.1']
    %12 = vsyncpa [#allocation3], 0
    %13 = vsyncpa [#allocation5], 0
    // Predicated region
    $region2: #{odconv_layer1.1} parent=1 // pred_check
      _
    $region3: #{odconv_layer1.1} parent=1 // pred_check_branch
      %15 = sbr.rel (0) target = $region5
    $region4: #{odconv_layer1.1} parent=1 // pred_region
      _
    $region5: #{odconv_layer1.1} parent=1 // pred_fallthru
      _
    // Predicated region
    $region6: #{odconv_layer1.1} parent=1 // pred_check
      _
    $region7: #{odconv_layer1.1} parent=1 // pred_check_branch
      %17 = sbr.rel (0) target = $region9
    $region8: #{odconv_layer1.1} parent=1 // pred_region
      _
    $region9: #{odconv_layer1.1} parent=1 // pred_fallthru
      _
    // Predicated region
    $region10: #{odconv_layer1.1} parent=1 // pred_check
      _
    $region11: #{odconv_layer1.1} parent=1 // pred_check_branch
      %19 = sbr.rel (0) target = $region13
    $region12: #{odconv_layer1.1} parent=1 // pred_region
      _
    $region13: #{odconv_layer1.1} parent=1 // pred_fallthru
      _
    // Predicated region
    $region14: #{odconv_layer1.1} parent=1 // pred_check
      _
    $region15: #{odconv_layer1.1} parent=1 // pred_check_branch
      %21 = sbr.rel (0) target = $region17
    $region16: #{odconv_layer1.1} parent=1 // pred_region
      _
    $region17: #{odconv_layer1.1} parent=1 // pred_fallthru
      _
    // Predicated region
    $region18: #{odconv_layer1.1} parent=1 // pred_check
      _
    $region19: #{odconv_layer1.1} parent=1 // pred_check_branch
      %23 = sbr.rel (0) target = $region21
    $region20: #{odconv_layer1.1} parent=1 // pred_region
      %s25 = ssub.s32 4096, 4096
      %26 = vsyncadd [#allocation3], %s25
      %s27 = sshll.u32 [#allocation2], 4
      %s28 = int_to_ptr.vmem [resolvable:$true] %s27
      %33 = dma.hbm_to_vmem [thread:$0]  %s4, 4096, %s28, [#allocation3], 512, 512, 32
    $region21: #{odconv_layer1.1} parent=1 // pred_fallthru
      _
    // Predicated region
    $region22: #{odconv_layer1.1} parent=1 // pred_check
      _
    $region23: #{odconv_layer1.1} parent=1 // pred_check_branch
      %35 = sbr.rel (0) target = $region25
    $region24: #{odconv_layer1.1} parent=1 // pred_region
      %s37 = ssub.s32 4096, 4096
      %38 = vsyncadd [#allocation5], %s37
      %s39 = sshll.u32 [#allocation4], 4
      %s40 = int_to_ptr.vmem [resolvable:$true] %s39
      %45 = dma.hbm_to_vmem [thread:$0]  %s5, 4096, %s40, [#allocation5], 512, 512, 32
    $region25: #{odconv_layer1.1} parent=1 // pred_fallthru
      _
    // Predicated region
    $region26: #{odconv_layer1.1} parent=1 // pred_check
      _
    $region27: #{odconv_layer1.1} parent=1 // pred_check_branch
      %47 = sbr.rel (0) target = $region29
    $region28: #{odconv_layer1.1} parent=1 // pred_region
      _
    $region29: #{odconv_layer1.1} parent=1 // pred_fallthru
      _
    // Predicated region
    $region30: #{odconv_layer1.1} parent=1 // pred_check
      _
    $region31: #{odconv_layer1.1} parent=1 // pred_check_branch
      %49 = sbr.rel (0) target = $region33
    $region32: #{odconv_layer1.1} parent=1 // pred_region
      %50 = dma.done [#allocation3], 4096
    $region33: #{odconv_layer1.1} parent=1 // pred_fallthru
      _
    // Predicated region
    $region34: #{odconv_layer1.1} parent=1 // pred_check
      _
    $region35: #{odconv_layer1.1} parent=1 // pred_check_branch
      %52 = sbr.rel (0) target = $region37
    $region36: #{odconv_layer1.1} parent=1 // pred_region
      %53 = dma.done [#allocation5], 4096
    $region37: #{odconv_layer1.1} parent=1 // pred_fallthru
      _
    %v54 = vld [vmem:[%s0] sm:$0xff]
    %v55 = vld [vmem:[%s0 + $0x8] sm:$0xff]
    %v56 = vld [vmem:[%s1] sm:$0xff]
    %v57 = vld [vmem:[%s1 + $0x8] sm:$0xff]
    %vm58 = vcmask 130048
    %v60 = vsel %vm58, %v56, 0
    %v63 = vsel %vm58, %v57, 0
    %65 = vmatprep.subr.mxu0 0.0
    %66 = vmatpush1.msra.mxu0 0.0
    %67 = vmatprep.subr.mxu0 0.0
    %68 = vmatpush1.msra.mxu0 0.0
    %69 = vmatprep.subr.mxu0 0.0
    %70 = vmatpush1.msra.mxu0 0.0
    %71 = vmatprep.subr.mxu0 0.0
    %72 = vmatpush1.msra.mxu0 0.0
    %73 = vmatprep.subr.mxu0 0.0
    %74 = vmatpush1.msra.mxu0 0.0
    %75 = vmatprep.subr.mxu0 0.0
    %76 = vmatpush1.msra.mxu0 0.0
    %77 = vmatprep.subr.mxu0 0.0
    %78 = vmatpush1.msra.mxu0 0.0
    %79 = vmatprep.subr.mxu0 0.0
    %80 = vmatpush1.msra.mxu0 0.0
    %81 = vmatprep.subr.mxu0 0.0
    %82 = vmatpush1.msra.mxu0 0.0
    %83 = vmatprep.subr.mxu0 0.0
    %84 = vmatpush1.msra.mxu0 0.0
    %85 = vmatprep.subr.mxu0 0.0
    %86 = vmatpush1.msra.mxu0 0.0
    %87 = vmatprep.subr.mxu0 0.0
    %88 = vmatpush1.msra.mxu0 0.0
    %89 = vmatprep.subr.mxu0 0.0
    %90 = vmatpush1.msra.mxu0 0.0
    %91 = vmatprep.subr.mxu0 0.0
    %92 = vmatpush1.msra.mxu0 0.0
    %93 = vmatprep.subr.mxu0 0.0
    %94 = vmatpush1.msra.mxu0 %v55
    %95 = vmatprep.subr.mxu0 0.0
    %96 = vmatpush1.msra.mxu0 %v54
    %97 = vmatprep.subr.mxu0 0.0
    %98 = vmatpush2.msra.mxu0 0.0
    %99 = vmatprep.subr.mxu0 0.0
    %100 = vmatpush2.msra.mxu0 0.0
    %101 = vmatprep.subr.mxu0 0.0
    %102 = vmatpush2.msra.mxu0 0.0
    %103 = vmatprep.subr.mxu0 0.0
    %104 = vmatpush2.msra.mxu0 0.0
    %105 = vmatprep.subr.mxu0 0.0
    %106 = vmatpush2.msra.mxu0 0.0
    %107 = vmatprep.subr.mxu0 0.0
    %108 = vmatpush2.msra.mxu0 0.0
    %109 = vmatprep.subr.mxu0 0.0
    %110 = vmatpush2.msra.mxu0 0.0
    %111 = vmatprep.subr.mxu0 0.0
    %112 = vmatpush2.msra.mxu0 0.0
    %113 = vmatprep.subr.mxu0 0.0
    %114 = vmatpush2.msra.mxu0 0.0
    %115 = vmatprep.subr.mxu0 0.0
    %116 = vmatpush2.msra.mxu0 0.0
    %117 = vmatprep.subr.mxu0 0.0
    %118 = vmatpush2.msra.mxu0 0.0
    %119 = vmatprep.subr.mxu0 0.0
    %120 = vmatpush2.msra.mxu0 0.0
    %121 = vmatprep.subr.mxu0 0.0
    %122 = vmatpush2.msra.mxu0 0.0
    %123 = vmatprep.subr.mxu0 0.0
    %124 = vmatpush2.msra.mxu0 0.0
    %125 = vmatprep.subr.mxu0 0.0
    %126 = vmatpush2.msra.mxu0 0.0
    %127 = vmatprep.subr.mxu0 0.0
    %128 = vmatpush2.msra.mxu0 0.0
    %129 = vmatprep.mubr.f32.mxu0 0.0
    %130 = vmatmul.mubr.f32.gmra.mxu0 %v60
    %v131 = vpop.f32.mrf.mxu0
    %v132 = vadd.f32 0.0, %v131
    %v133 = vpop.f32.mrf.mxu0
    %134 = vmatprep.mubr.f32.mxu0 0.0
    %135 = vmatmul.mubr.f32.gmra.mxu0 %v63
    %v136 = vpop.f32.mrf.mxu0
    %v137 = vadd.f32 0.0, %v136
    %v138 = vpop.f32.mrf.mxu0
    %139 = vdwg.mxu0
    %v140 = vld [vmem:[%s2] sm:$0xff]
    %v141 = vld [vmem:[%s2 + $0x8] sm:$0xff]
    %v143 = vsel %vm58, %v140, 0
    %v146 = vsel %vm58, %v141, 0
    %148 = vmatprep.subr.mxu0 0.0
    %149 = vmatpush1.msra.mxu0 0.0
    %150 = vmatprep.subr.mxu0 0.0
    %151 = vmatpush1.msra.mxu0 0.0
    %152 = vmatprep.subr.mxu0 0.0
    %153 = vmatpush1.msra.mxu0 0.0
    %154 = vmatprep.subr.mxu0 0.0
    %155 = vmatpush1.msra.mxu0 0.0
    %156 = vmatprep.subr.mxu0 0.0
    %157 = vmatpush1.msra.mxu0 0.0
    %158 = vmatprep.subr.mxu0 0.0
    %159 = vmatpush1.msra.mxu0 0.0
    %160 = vmatprep.subr.mxu0 0.0
    %161 = vmatpush1.msra.mxu0 0.0
    %162 = vmatprep.subr.mxu0 0.0
    %163 = vmatpush1.msra.mxu0 0.0
    %164 = vmatprep.subr.mxu0 0.0
    %165 = vmatpush1.msra.mxu0 0.0
    %166 = vmatprep.subr.mxu0 0.0
    %167 = vmatpush1.msra.mxu0 0.0
    %168 = vmatprep.subr.mxu0 0.0
    %169 = vmatpush1.msra.mxu0 0.0
    %170 = vmatprep.subr.mxu0 0.0
    %171 = vmatpush1.msra.mxu0 0.0
    %172 = vmatprep.subr.mxu0 0.0
    %173 = vmatpush1.msra.mxu0 0.0
    %174 = vmatprep.subr.mxu0 0.0
    %175 = vmatpush1.msra.mxu0 0.0
    %176 = vmatprep.subr.mxu0 0.0
    %177 = vmatpush1.msra.mxu0 %v55
    %178 = vmatprep.subr.mxu0 0.0
    %179 = vmatpush1.msra.mxu0 %v54
    %180 = vmatprep.subr.mxu0 0.0
    %181 = vmatpush2.msra.mxu0 0.0
    %182 = vmatprep.subr.mxu0 0.0
    %183 = vmatpush2.msra.mxu0 0.0
    %184 = vmatprep.subr.mxu0 0.0
    %185 = vmatpush2.msra.mxu0 0.0
    %186 = vmatprep.subr.mxu0 0.0
    %187 = vmatpush2.msra.mxu0 0.0
    %188 = vmatprep.subr.mxu0 0.0
    %189 = vmatpush2.msra.mxu0 0.0
    %190 = vmatprep.subr.mxu0 0.0
    %191 = vmatpush2.msra.mxu0 0.0
    %192 = vmatprep.subr.mxu0 0.0
    %193 = vmatpush2.msra.mxu0 0.0
    %194 = vmatprep.subr.mxu0 0.0
    %195 = vmatpush2.msra.mxu0 0.0
    %196 = vmatprep.subr.mxu0 0.0
    %197 = vmatpush2.msra.mxu0 0.0
    %198 = vmatprep.subr.mxu0 0.0
    %199 = vmatpush2.msra.mxu0 0.0
    %200 = vmatprep.subr.mxu0 0.0
    %201 = vmatpush2.msra.mxu0 0.0
    %202 = vmatprep.subr.mxu0 0.0
    %203 = vmatpush2.msra.mxu0 0.0
    %204 = vmatprep.subr.mxu0 0.0
    %205 = vmatpush2.msra.mxu0 0.0
    %206 = vmatprep.subr.mxu0 0.0
    %207 = vmatpush2.msra.mxu0 0.0
    %208 = vmatprep.subr.mxu0 0.0
    %209 = vmatpush2.msra.mxu0 0.0
    %210 = vmatprep.subr.mxu0 0.0
    %211 = vmatpush2.msra.mxu0 0.0
    %212 = vmatprep.mubr.f32.mxu0 0.0
    %213 = vmatmul.mubr.f32.gmra.mxu0 %v143
    %v214 = vpop.f32.mrf.mxu0
    %v215 = vadd.f32 0.0, %v214
    %v216 = vpop.f32.mrf.mxu0
    %217 = vmatprep.mubr.f32.mxu0 0.0
    %218 = vmatmul.mubr.f32.gmra.mxu0 %v146
    %v219 = vpop.f32.mrf.mxu0
    %v220 = vadd.f32 0.0, %v219
    %v221 = vpop.f32.mrf.mxu0
    %222 = vdwg.mxu0
    %v223 = vld [vmem:[%s3] sm:$0xff]
    %v224 = vld [vmem:[%s3 + $0x8] sm:$0xff]
    %v225 = vld [vmem:[%s3 + $0x10] sm:$0xff]
    %v226 = vld [vmem:[%s3 + $0x18] sm:$0xff]
    %v227 = vld [vmem:[%s3 + $0x20] sm:$0xff]
    %v228 = vld [vmem:[%s3 + $0x28] sm:$0xff]
    %v229 = vld [vmem:[%s3 + $0x30] sm:$0xff]
    %v230 = vld [vmem:[%s3 + $0x38] sm:$0xff]
    %v231 = vld [vmem:[%s3 + $0x40] sm:$0xff]
    %v232 = vld [vmem:[%s3 + $0x48] sm:$0xff]
    %v233 = vld [vmem:[%s3 + $0x50] sm:$0xff]
    %v234 = vld [vmem:[%s3 + $0x58] sm:$0xff]
    %v235 = vld [vmem:[%s3 + $0x60] sm:$0xff]
    %v236 = vld [vmem:[%s3 + $0x68] sm:$0xff]
    %v237 = vld [vmem:[%s3 + $0x70] sm:$0xff]
    %v238 = vld [vmem:[%s3 + $0x78] sm:$0xff]
    %v239 = vld [vmem:[%s3 + $0x80] sm:$0xff]
    %v240 = vld [vmem:[%s3 + $0x88] sm:$0xff]
    %v241 = vld [vmem:[%s3 + $0x90] sm:$0xff]
    %v242 = vld [vmem:[%s3 + $0x98] sm:$0xff]
    %v243 = vld [vmem:[%s3 + $0xa0] sm:$0xff]
    %v244 = vld [vmem:[%s3 + $0xa8] sm:$0xff]
    %v245 = vld [vmem:[%s3 + $0xb0] sm:$0xff]
    %v246 = vld [vmem:[%s3 + $0xb8] sm:$0xff]
    %v247 = vld [vmem:[%s3 + $0xc0] sm:$0xff]
    %v248 = vld [vmem:[%s3 + $0xc8] sm:$0xff]
    %v249 = vld [vmem:[%s3 + $0xd0] sm:$0xff]
    %v250 = vld [vmem:[%s3 + $0xd8] sm:$0xff]
    %v251 = vld [vmem:[%s3 + $0xe0] sm:$0xff]
    %v252 = vld [vmem:[%s3 + $0xe8] sm:$0xff]
    %v253 = vld [vmem:[%s3 + $0xf0] sm:$0xff]
    %v254 = vld [vmem:[%s3 + $0xf8] sm:$0xff]
    %v255 = vld [vmem:[#allocation2] sm:$0xff]
    %v256 = vld [vmem:[#allocation2 + $0x8] sm:$0xff]
    %v257 = vld [vmem:[#allocation2 + $0x10] sm:$0xff]
    %v258 = vld [vmem:[#allocation2 + $0x18] sm:$0xff]
    %v259 = vld [vmem:[#allocation2 + $0x20] sm:$0xff]
    %v260 = vld [vmem:[#allocation2 + $0x28] sm:$0xff]
    %v261 = vld [vmem:[#allocation2 + $0x30] sm:$0xff]
    %v262 = vld [vmem:[#allocation2 + $0x38] sm:$0xff]
    %v263 = vld [vmem:[#allocation2 + $0x40] sm:$0xff]
    %v264 = vld [vmem:[#allocation2 + $0x48] sm:$0xff]
    %v265 = vld [vmem:[#allocation2 + $0x50] sm:$0xff]
    %v266 = vld [vmem:[#allocation2 + $0x58] sm:$0xff]
    %v267 = vld [vmem:[#allocation2 + $0x60] sm:$0xff]
    %v268 = vld [vmem:[#allocation2 + $0x68] sm:$0xff]
    %v269 = vld [vmem:[#allocation2 + $0x70] sm:$0xff]
    %v270 = vld [vmem:[#allocation2 + $0x78] sm:$0xff]
    %v271 = vld [vmem:[#allocation2 + $0x80] sm:$0xff]
    %v272 = vld [vmem:[#allocation2 + $0x88] sm:$0xff]
    %v273 = vld [vmem:[#allocation2 + $0x90] sm:$0xff]
    %v274 = vld [vmem:[#allocation2 + $0x98] sm:$0xff]
    %v275 = vld [vmem:[#allocation2 + $0xa0] sm:$0xff]
    %v276 = vld [vmem:[#allocation2 + $0xa8] sm:$0xff]
    %v277 = vld [vmem:[#allocation2 + $0xb0] sm:$0xff]
    %v278 = vld [vmem:[#allocation2 + $0xb8] sm:$0xff]
    %v279 = vld [vmem:[#allocation2 + $0xc0] sm:$0xff]
    %v280 = vld [vmem:[#allocation2 + $0xc8] sm:$0xff]
    %v281 = vld [vmem:[#allocation2 + $0xd0] sm:$0xff]
    %v282 = vld [vmem:[#allocation2 + $0xd8] sm:$0xff]
    %v283 = vld [vmem:[#allocation2 + $0xe0] sm:$0xff]
    %v284 = vld [vmem:[#allocation2 + $0xe8] sm:$0xff]
    %v285 = vld [vmem:[#allocation2 + $0xf0] sm:$0xff]
    %v286 = vld [vmem:[#allocation2 + $0xf8] sm:$0xff]
    %vm287 = vcmask 523264
    %v289 = vsel %vm287, %v132, 0
    %v292 = vsel %vm287, %v137, 0
    %294 = vmatprep.subr.mxu0 0.0
    %295 = vmatpush1.msra.mxu0 0.0
    %296 = vmatprep.subr.mxu0 0.0
    %297 = vmatpush1.msra.mxu0 0.0
    %298 = vmatprep.subr.mxu0 0.0
    %299 = vmatpush1.msra.mxu0 0.0
    %300 = vmatprep.subr.mxu0 0.0
    %301 = vmatpush1.msra.mxu0 0.0
    %302 = vmatprep.subr.mxu0 0.0
    %303 = vmatpush1.msra.mxu0 0.0
    %304 = vmatprep.subr.mxu0 0.0
    %305 = vmatpush1.msra.mxu0 0.0
    %306 = vmatprep.subr.mxu0 0.0
    %307 = vmatpush1.msra.mxu0 0.0
    %308 = vmatprep.subr.mxu0 0.0
    %309 = vmatpush1.msra.mxu0 0.0
    %310 = vmatprep.subr.mxu0 %v284
    %311 = vmatpush1.msra.mxu0 %v283
    %312 = vmatprep.subr.mxu0 %v280
    %313 = vmatpush1.msra.mxu0 %v279
    %314 = vmatprep.subr.mxu0 %v276
    %315 = vmatpush1.msra.mxu0 %v275
    %316 = vmatprep.subr.mxu0 %v272
    %317 = vmatpush1.msra.mxu0 %v271
    %318 = vmatprep.subr.mxu0 %v268
    %319 = vmatpush1.msra.mxu0 %v267
    %320 = vmatprep.subr.mxu0 %v264
    %321 = vmatpush1.msra.mxu0 %v263
    %322 = vmatprep.subr.mxu0 %v260
    %323 = vmatpush1.msra.mxu0 %v259
    %324 = vmatprep.subr.mxu0 %v256
    %325 = vmatpush1.msra.mxu0 %v255
    %326 = vmatprep.subr.mxu0 0.0
    %327 = vmatpush2.msra.mxu0 0.0
    %328 = vmatprep.subr.mxu0 0.0
    %329 = vmatpush2.msra.mxu0 0.0
    %330 = vmatprep.subr.mxu0 0.0
    %331 = vmatpush2.msra.mxu0 0.0
    %332 = vmatprep.subr.mxu0 0.0
    %333 = vmatpush2.msra.mxu0 0.0
    %334 = vmatprep.subr.mxu0 0.0
    %335 = vmatpush2.msra.mxu0 0.0
    %336 = vmatprep.subr.mxu0 0.0
    %337 = vmatpush2.msra.mxu0 0.0
    %338 = vmatprep.subr.mxu0 0.0
    %339 = vmatpush2.msra.mxu0 0.0
    %340 = vmatprep.subr.mxu0 0.0
    %341 = vmatpush2.msra.mxu0 0.0
    %342 = vmatprep.subr.mxu0 0.0
    %343 = vmatpush2.msra.mxu0 0.0
    %344 = vmatprep.subr.mxu0 0.0
    %345 = vmatpush2.msra.mxu0 0.0
    %346 = vmatprep.subr.mxu0 0.0
    %347 = vmatpush2.msra.mxu0 0.0
    %348 = vmatprep.subr.mxu0 0.0
    %349 = vmatpush2.msra.mxu0 0.0
    %350 = vmatprep.subr.mxu0 0.0
    %351 = vmatpush2.msra.mxu0 0.0
    %352 = vmatprep.subr.mxu0 0.0
    %353 = vmatpush2.msra.mxu0 0.0
    %354 = vmatprep.subr.mxu0 0.0
    %355 = vmatpush2.msra.mxu0 0.0
    %356 = vmatprep.subr.mxu0 0.0
    %357 = vmatpush2.msra.mxu0 0.0
    %358 = vmatprep.mubr.f32.mxu0 0.0
    %359 = vmatmul.mubr.f32.gmra.mxu0 %v289
    %v360 = vpop.f32.mrf.mxu0
    %v361 = vadd.f32 0.0, %v360
    %v362 = vpop.f32.mrf.mxu0
    %v363 = vadd.f32 0.0, %v362
    %364 = vmatprep.mubr.f32.mxu0 0.0
    %365 = vmatmul.mubr.f32.gmra.mxu0 %v292
    %v366 = vpop.f32.mrf.mxu0
    %v367 = vadd.f32 0.0, %v366
    %v368 = vpop.f32.mrf.mxu0
    %v369 = vadd.f32 0.0, %v368
    %370 = vdwg.mxu0
    %371 = vmatprep.subr.mxu0 0.0
    %372 = vmatpush1.msra.mxu0 0.0
    %373 = vmatprep.subr.mxu0 0.0
    %374 = vmatpush1.msra.mxu0 0.0
    %375 = vmatprep.subr.mxu0 0.0
    %376 = vmatpush1.msra.mxu0 0.0
    %377 = vmatprep.subr.mxu0 0.0
    %378 = vmatpush1.msra.mxu0 0.0
    %379 = vmatprep.subr.mxu0 0.0
    %380 = vmatpush1.msra.mxu0 0.0
    %381 = vmatprep.subr.mxu0 0.0
    %382 = vmatpush1.msra.mxu0 0.0
    %383 = vmatprep.subr.mxu0 0.0
    %384 = vmatpush1.msra.mxu0 0.0
    %385 = vmatprep.subr.mxu0 0.0
    %386 = vmatpush1.msra.mxu0 0.0
    %387 = vmatprep.subr.mxu0 %v286
    %388 = vmatpush1.msra.mxu0 %v285
    %389 = vmatprep.subr.mxu0 %v282
    %390 = vmatpush1.msra.mxu0 %v281
    %391 = vmatprep.subr.mxu0 %v278
    %392 = vmatpush1.msra.mxu0 %v277
    %393 = vmatprep.subr.mxu0 %v274
    %394 = vmatpush1.msra.mxu0 %v273
    %395 = vmatprep.subr.mxu0 %v270
    %396 = vmatpush1.msra.mxu0 %v269
    %397 = vmatprep.subr.mxu0 %v266
    %398 = vmatpush1.msra.mxu0 %v265
    %399 = vmatprep.subr.mxu0 %v262
    %400 = vmatpush1.msra.mxu0 %v261
    %401 = vmatprep.subr.mxu0 %v258
    %402 = vmatpush1.msra.mxu0 %v257
    %403 = vmatprep.subr.mxu0 0.0
    %404 = vmatpush2.msra.mxu0 0.0
    %405 = vmatprep.subr.mxu0 0.0
    %406 = vmatpush2.msra.mxu0 0.0
    %407 = vmatprep.subr.mxu0 0.0
    %408 = vmatpush2.msra.mxu0 0.0
    %409 = vmatprep.subr.mxu0 0.0
    %410 = vmatpush2.msra.mxu0 0.0
    %411 = vmatprep.subr.mxu0 0.0
    %412 = vmatpush2.msra.mxu0 0.0
    %413 = vmatprep.subr.mxu0 0.0
    %414 = vmatpush2.msra.mxu0 0.0
    %415 = vmatprep.subr.mxu0 0.0
    %416 = vmatpush2.msra.mxu0 0.0
    %417 = vmatprep.subr.mxu0 0.0
    %418 = vmatpush2.msra.mxu0 0.0
    %419 = vmatprep.subr.mxu0 0.0
    %420 = vmatpush2.msra.mxu0 0.0
    %421 = vmatprep.subr.mxu0 0.0
    %422 = vmatpush2.msra.mxu0 0.0
    %423 = vmatprep.subr.mxu0 0.0
    %424 = vmatpush2.msra.mxu0 0.0
    %425 = vmatprep.subr.mxu0 0.0
    %426 = vmatpush2.msra.mxu0 0.0
    %427 = vmatprep.subr.mxu0 0.0
    %428 = vmatpush2.msra.mxu0 0.0
    %429 = vmatprep.subr.mxu0 0.0
    %430 = vmatpush2.msra.mxu0 0.0
    %431 = vmatprep.subr.mxu0 0.0
    %432 = vmatpush2.msra.mxu0 0.0
    %433 = vmatprep.subr.mxu0 0.0
    %434 = vmatpush2.msra.mxu0 0.0
    %435 = vmatprep.mubr.f32.mxu0 0.0
    %436 = vmatmul.mubr.f32.gmra.mxu0 %v289
    %v437 = vpop.f32.mrf.mxu0
    %v438 = vadd.f32 0.0, %v437
    %v439 = vpop.f32.mrf.mxu0
    %v440 = vadd.f32 0.0, %v439
    %441 = vmatprep.mubr.f32.mxu0 0.0
    %442 = vmatmul.mubr.f32.gmra.mxu0 %v292
    %v443 = vpop.f32.mrf.mxu0
    %v444 = vadd.f32 0.0, %v443
    %v445 = vpop.f32.mrf.mxu0
    %v446 = vadd.f32 0.0, %v445
    %447 = vdwg.mxu0
    %v449 = vsel %vm287, %v54, 0
    %v452 = vsel %vm287, %v55, 0
    %454 = vmatprep.subr.mxu0 0.0
    %455 = vmatpush1.msra.mxu0 0.0
    %456 = vmatprep.subr.mxu0 0.0
    %457 = vmatpush1.msra.mxu0 0.0
    %458 = vmatprep.subr.mxu0 0.0
    %459 = vmatpush1.msra.mxu0 0.0
    %460 = vmatprep.subr.mxu0 0.0
    %461 = vmatpush1.msra.mxu0 0.0
    %462 = vmatprep.subr.mxu0 0.0
    %463 = vmatpush1.msra.mxu0 0.0
    %464 = vmatprep.subr.mxu0 0.0
    %465 = vmatpush1.msra.mxu0 0.0
    %466 = vmatprep.subr.mxu0 0.0
    %467 = vmatpush1.msra.mxu0 0.0
    %468 = vmatprep.subr.mxu0 0.0
    %469 = vmatpush1.msra.mxu0 0.0
    %470 = vmatprep.subr.mxu0 %v252
    %471 = vmatpush1.msra.mxu0 %v251
    %472 = vmatprep.subr.mxu0 %v248
    %473 = vmatpush1.msra.mxu0 %v247
    %474 = vmatprep.subr.mxu0 %v244
    %475 = vmatpush1.msra.mxu0 %v243
    %476 = vmatprep.subr.mxu0 %v240
    %477 = vmatpush1.msra.mxu0 %v239
    %478 = vmatprep.subr.mxu0 %v236
    %479 = vmatpush1.msra.mxu0 %v235
    %480 = vmatprep.subr.mxu0 %v232
    %481 = vmatpush1.msra.mxu0 %v231
    %482 = vmatprep.subr.mxu0 %v228
    %483 = vmatpush1.msra.mxu0 %v227
    %484 = vmatprep.subr.mxu0 %v224
    %485 = vmatpush1.msra.mxu0 %v223
    %486 = vmatprep.subr.mxu0 0.0
    %487 = vmatpush2.msra.mxu0 0.0
    %488 = vmatprep.subr.mxu0 0.0
    %489 = vmatpush2.msra.mxu0 0.0
    %490 = vmatprep.subr.mxu0 0.0
    %491 = vmatpush2.msra.mxu0 0.0
    %492 = vmatprep.subr.mxu0 0.0
    %493 = vmatpush2.msra.mxu0 0.0
    %494 = vmatprep.subr.mxu0 0.0
    %495 = vmatpush2.msra.mxu0 0.0
    %496 = vmatprep.subr.mxu0 0.0
    %497 = vmatpush2.msra.mxu0 0.0
    %498 = vmatprep.subr.mxu0 0.0
    %499 = vmatpush2.msra.mxu0 0.0
    %500 = vmatprep.subr.mxu0 0.0
    %501 = vmatpush2.msra.mxu0 0.0
    %502 = vmatprep.subr.mxu0 0.0
    %503 = vmatpush2.msra.mxu0 0.0
    %504 = vmatprep.subr.mxu0 0.0
    %505 = vmatpush2.msra.mxu0 0.0
    %506 = vmatprep.subr.mxu0 0.0
    %507 = vmatpush2.msra.mxu0 0.0
    %508 = vmatprep.subr.mxu0 0.0
    %509 = vmatpush2.msra.mxu0 0.0
    %510 = vmatprep.subr.mxu0 0.0
    %511 = vmatpush2.msra.mxu0 0.0
    %512 = vmatprep.subr.mxu0 0.0
    %513 = vmatpush2.msra.mxu0 0.0
    %514 = vmatprep.subr.mxu0 0.0
    %515 = vmatpush2.msra.mxu0 0.0
    %516 = vmatprep.subr.mxu0 0.0
    %517 = vmatpush2.msra.mxu0 0.0
    %518 = vmatprep.mubr.f32.mxu0 0.0
    %519 = vmatmul.mubr.f32.gmra.mxu0 %v449
    %v520 = vpop.f32.mrf.mxu0
    %v521 = vadd.f32 %v361, %v520
    %v522 = vpop.f32.mrf.mxu0
    %v523 = vadd.f32 %v363, %v522
    %524 = vmatprep.mubr.f32.mxu0 0.0
    %525 = vmatmul.mubr.f32.gmra.mxu0 %v452
    %v526 = vpop.f32.mrf.mxu0
    %v527 = vadd.f32 %v367, %v526
    %v528 = vpop.f32.mrf.mxu0
    %v529 = vadd.f32 %v369, %v528
    %530 = vdwg.mxu0
    %531 = vmatprep.subr.mxu0 0.0
    %532 = vmatpush1.msra.mxu0 0.0
    %533 = vmatprep.subr.mxu0 0.0
    %534 = vmatpush1.msra.mxu0 0.0
    %535 = vmatprep.subr.mxu0 0.0
    %536 = vmatpush1.msra.mxu0 0.0
    %537 = vmatprep.subr.mxu0 0.0
    %538 = vmatpush1.msra.mxu0 0.0
    %539 = vmatprep.subr.mxu0 0.0
    %540 = vmatpush1.msra.mxu0 0.0
    %541 = vmatprep.subr.mxu0 0.0
    %542 = vmatpush1.msra.mxu0 0.0
    %543 = vmatprep.subr.mxu0 0.0
    %544 = vmatpush1.msra.mxu0 0.0
    %545 = vmatprep.subr.mxu0 0.0
    %546 = vmatpush1.msra.mxu0 0.0
    %547 = vmatprep.subr.mxu0 %v254
    %548 = vmatpush1.msra.mxu0 %v253
    %549 = vmatprep.subr.mxu0 %v250
    %550 = vmatpush1.msra.mxu0 %v249
    %551 = vmatprep.subr.mxu0 %v246
    %552 = vmatpush1.msra.mxu0 %v245
    %553 = vmatprep.subr.mxu0 %v242
    %554 = vmatpush1.msra.mxu0 %v241
    %555 = vmatprep.subr.mxu0 %v238
    %556 = vmatpush1.msra.mxu0 %v237
    %557 = vmatprep.subr.mxu0 %v234
    %558 = vmatpush1.msra.mxu0 %v233
    %559 = vmatprep.subr.mxu0 %v230
    %560 = vmatpush1.msra.mxu0 %v229
    %561 = vmatprep.subr.mxu0 %v226
    %562 = vmatpush1.msra.mxu0 %v225
    %563 = vmatprep.subr.mxu0 0.0
    %564 = vmatpush2.msra.mxu0 0.0
    %565 = vmatprep.subr.mxu0 0.0
    %566 = vmatpush2.msra.mxu0 0.0
    %567 = vmatprep.subr.mxu0 0.0
    %568 = vmatpush2.msra.mxu0 0.0
    %569 = vmatprep.subr.mxu0 0.0
    %570 = vmatpush2.msra.mxu0 0.0
    %571 = vmatprep.subr.mxu0 0.0
    %572 = vmatpush2.msra.mxu0 0.0
    %573 = vmatprep.subr.mxu0 0.0
    %574 = vmatpush2.msra.mxu0 0.0
    %575 = vmatprep.subr.mxu0 0.0
    %576 = vmatpush2.msra.mxu0 0.0
    %577 = vmatprep.subr.mxu0 0.0
    %578 = vmatpush2.msra.mxu0 0.0
    %579 = vmatprep.subr.mxu0 0.0
    %580 = vmatpush2.msra.mxu0 0.0
    %581 = vmatprep.subr.mxu0 0.0
    %582 = vmatpush2.msra.mxu0 0.0
    %583 = vmatprep.subr.mxu0 0.0
    %584 = vmatpush2.msra.mxu0 0.0
    %585 = vmatprep.subr.mxu0 0.0
    %586 = vmatpush2.msra.mxu0 0.0
    %587 = vmatprep.subr.mxu0 0.0
    %588 = vmatpush2.msra.mxu0 0.0
    %589 = vmatprep.subr.mxu0 0.0
    %590 = vmatpush2.msra.mxu0 0.0
    %591 = vmatprep.subr.mxu0 0.0
    %592 = vmatpush2.msra.mxu0 0.0
    %593 = vmatprep.subr.mxu0 0.0
    %594 = vmatpush2.msra.mxu0 0.0
    %595 = vmatprep.mubr.f32.mxu0 0.0
    %596 = vmatmul.mubr.f32.gmra.mxu0 %v449
    %v597 = vpop.f32.mrf.mxu0
    %v598 = vadd.f32 %v438, %v597
    %v599 = vpop.f32.mrf.mxu0
    %v600 = vadd.f32 %v440, %v599
    %601 = vmatprep.mubr.f32.mxu0 0.0
    %602 = vmatmul.mubr.f32.gmra.mxu0 %v452
    %v603 = vpop.f32.mrf.mxu0
    %v604 = vadd.f32 %v444, %v603
    %v605 = vpop.f32.mrf.mxu0
    %v606 = vadd.f32 %v446, %v605
    %607 = vdwg.mxu0
    %v608 = vld [vmem:[#allocation4] sm:$0xff]
    %v609 = vld [vmem:[#allocation4 + $0x8] sm:$0xff]
    %v610 = vld [vmem:[#allocation4 + $0x10] sm:$0xff]
    %v611 = vld [vmem:[#allocation4 + $0x18] sm:$0xff]
    %v612 = vld [vmem:[#allocation4 + $0x20] sm:$0xff]
    %v613 = vld [vmem:[#allocation4 + $0x28] sm:$0xff]
    %v614 = vld [vmem:[#allocation4 + $0x30] sm:$0xff]
    %v615 = vld [vmem:[#allocation4 + $0x38] sm:$0xff]
    %v616 = vld [vmem:[#allocation4 + $0x40] sm:$0xff]
    %v617 = vld [vmem:[#allocation4 + $0x48] sm:$0xff]
    %v618 = vld [vmem:[#allocation4 + $0x50] sm:$0xff]
    %v619 = vld [vmem:[#allocation4 + $0x58] sm:$0xff]
    %v620 = vld [vmem:[#allocation4 + $0x60] sm:$0xff]
    %v621 = vld [vmem:[#allocation4 + $0x68] sm:$0xff]
    %v622 = vld [vmem:[#allocation4 + $0x70] sm:$0xff]
    %v623 = vld [vmem:[#allocation4 + $0x78] sm:$0xff]
    %v624 = vld [vmem:[#allocation4 + $0x80] sm:$0xff]
    %v625 = vld [vmem:[#allocation4 + $0x88] sm:$0xff]
    %v626 = vld [vmem:[#allocation4 + $0x90] sm:$0xff]
    %v627 = vld [vmem:[#allocation4 + $0x98] sm:$0xff]
    %v628 = vld [vmem:[#allocation4 + $0xa0] sm:$0xff]
    %v629 = vld [vmem:[#allocation4 + $0xa8] sm:$0xff]
    %v630 = vld [vmem:[#allocation4 + $0xb0] sm:$0xff]
    %v631 = vld [vmem:[#allocation4 + $0xb8] sm:$0xff]
    %v632 = vld [vmem:[#allocation4 + $0xc0] sm:$0xff]
    %v633 = vld [vmem:[#allocation4 + $0xc8] sm:$0xff]
    %v634 = vld [vmem:[#allocation4 + $0xd0] sm:$0xff]
    %v635 = vld [vmem:[#allocation4 + $0xd8] sm:$0xff]
    %v636 = vld [vmem:[#allocation4 + $0xe0] sm:$0xff]
    %v637 = vld [vmem:[#allocation4 + $0xe8] sm:$0xff]
    %v638 = vld [vmem:[#allocation4 + $0xf0] sm:$0xff]
    %v639 = vld [vmem:[#allocation4 + $0xf8] sm:$0xff]
    %v641 = vsel %vm287, %v215, 0
    %v644 = vsel %vm287, %v220, 0
    %646 = vmatprep.subr.mxu0 0.0
    %647 = vmatpush1.msra.mxu0 0.0
    %648 = vmatprep.subr.mxu0 0.0
    %649 = vmatpush1.msra.mxu0 0.0
    %650 = vmatprep.subr.mxu0 0.0
    %651 = vmatpush1.msra.mxu0 0.0
    %652 = vmatprep.subr.mxu0 0.0
    %653 = vmatpush1.msra.mxu0 0.0
    %654 = vmatprep.subr.mxu0 0.0
    %655 = vmatpush1.msra.mxu0 0.0
    %656 = vmatprep.subr.mxu0 0.0
    %657 = vmatpush1.msra.mxu0 0.0
    %658 = vmatprep.subr.mxu0 0.0
    %659 = vmatpush1.msra.mxu0 0.0
    %660 = vmatprep.subr.mxu0 0.0
    %661 = vmatpush1.msra.mxu0 0.0
    %662 = vmatprep.subr.mxu0 %v637
    %663 = vmatpush1.msra.mxu0 %v636
    %664 = vmatprep.subr.mxu0 %v633
    %665 = vmatpush1.msra.mxu0 %v632
    %666 = vmatprep.subr.mxu0 %v629
    %667 = vmatpush1.msra.mxu0 %v628
    %668 = vmatprep.subr.mxu0 %v625
    %669 = vmatpush1.msra.mxu0 %v624
    %670 = vmatprep.subr.mxu0 %v621
    %671 = vmatpush1.msra.mxu0 %v620
    %672 = vmatprep.subr.mxu0 %v617
    %673 = vmatpush1.msra.mxu0 %v616
    %674 = vmatprep.subr.mxu0 %v613
    %675 = vmatpush1.msra.mxu0 %v612
    %676 = vmatprep.subr.mxu0 %v609
    %677 = vmatpush1.msra.mxu0 %v608
    %678 = vmatprep.subr.mxu0 0.0
    %679 = vmatpush2.msra.mxu0 0.0
    %680 = vmatprep.subr.mxu0 0.0
    %681 = vmatpush2.msra.mxu0 0.0
    %682 = vmatprep.subr.mxu0 0.0
    %683 = vmatpush2.msra.mxu0 0.0
    %684 = vmatprep.subr.mxu0 0.0
    %685 = vmatpush2.msra.mxu0 0.0
    %686 = vmatprep.subr.mxu0 0.0
    %687 = vmatpush2.msra.mxu0 0.0
    %688 = vmatprep.subr.mxu0 0.0
    %689 = vmatpush2.msra.mxu0 0.0
    %690 = vmatprep.subr.mxu0 0.0
    %691 = vmatpush2.msra.mxu0 0.0
    %692 = vmatprep.subr.mxu0 0.0
    %693 = vmatpush2.msra.mxu0 0.0
    %694 = vmatprep.subr.mxu0 0.0
    %695 = vmatpush2.msra.mxu0 0.0
    %696 = vmatprep.subr.mxu0 0.0
    %697 = vmatpush2.msra.mxu0 0.0
    %698 = vmatprep.subr.mxu0 0.0
    %699 = vmatpush2.msra.mxu0 0.0
    %700 = vmatprep.subr.mxu0 0.0
    %701 = vmatpush2.msra.mxu0 0.0
    %702 = vmatprep.subr.mxu0 0.0
    %703 = vmatpush2.msra.mxu0 0.0
    %704 = vmatprep.subr.mxu0 0.0
    %705 = vmatpush2.msra.mxu0 0.0
    %706 = vmatprep.subr.mxu0 0.0
    %707 = vmatpush2.msra.mxu0 0.0
    %708 = vmatprep.subr.mxu0 0.0
    %709 = vmatpush2.msra.mxu0 0.0
    %710 = vmatprep.mubr.f32.mxu0 0.0
    %711 = vmatmul.mubr.f32.gmra.mxu0 %v641
    %v712 = vpop.f32.mrf.mxu0
    %v713 = vadd.f32 0.0, %v712
    %v714 = vpop.f32.mrf.mxu0
    %v715 = vadd.f32 0.0, %v714
    %716 = vmatprep.mubr.f32.mxu0 0.0
    %717 = vmatmul.mubr.f32.gmra.mxu0 %v644
    %v718 = vpop.f32.mrf.mxu0
    %v719 = vadd.f32 0.0, %v718
    %v720 = vpop.f32.mrf.mxu0
    %v721 = vadd.f32 0.0, %v720
    %722 = vdwg.mxu0
    %723 = vmatprep.subr.mxu0 0.0
    %724 = vmatpush1.msra.mxu0 0.0
    %725 = vmatprep.subr.mxu0 0.0
    %726 = vmatpush1.msra.mxu0 0.0
    %727 = vmatprep.subr.mxu0 0.0
    %728 = vmatpush1.msra.mxu0 0.0
    %729 = vmatprep.subr.mxu0 0.0
    %730 = vmatpush1.msra.mxu0 0.0
    %731 = vmatprep.subr.mxu0 0.0
    %732 = vmatpush1.msra.mxu0 0.0
    %733 = vmatprep.subr.mxu0 0.0
    %734 = vmatpush1.msra.mxu0 0.0
    %735 = vmatprep.subr.mxu0 0.0
    %736 = vmatpush1.msra.mxu0 0.0
    %737 = vmatprep.subr.mxu0 0.0
    %738 = vmatpush1.msra.mxu0 0.0
    %739 = vmatprep.subr.mxu0 %v639
    %740 = vmatpush1.msra.mxu0 %v638
    %741 = vmatprep.subr.mxu0 %v635
    %742 = vmatpush1.msra.mxu0 %v634
    %743 = vmatprep.subr.mxu0 %v631
    %744 = vmatpush1.msra.mxu0 %v630
    %745 = vmatprep.subr.mxu0 %v627
    %746 = vmatpush1.msra.mxu0 %v626
    %747 = vmatprep.subr.mxu0 %v623
    %748 = vmatpush1.msra.mxu0 %v622
    %749 = vmatprep.subr.mxu0 %v619
    %750 = vmatpush1.msra.mxu0 %v618
    %751 = vmatprep.subr.mxu0 %v615
    %752 = vmatpush1.msra.mxu0 %v614
    %753 = vmatprep.subr.mxu0 %v611
    %754 = vmatpush1.msra.mxu0 %v610
    %755 = vmatprep.subr.mxu0 0.0
    %756 = vmatpush2.msra.mxu0 0.0
    %757 = vmatprep.subr.mxu0 0.0
    %758 = vmatpush2.msra.mxu0 0.0
    %759 = vmatprep.subr.mxu0 0.0
    %760 = vmatpush2.msra.mxu0 0.0
    %761 = vmatprep.subr.mxu0 0.0
    %762 = vmatpush2.msra.mxu0 0.0
    %763 = vmatprep.subr.mxu0 0.0
    %764 = vmatpush2.msra.mxu0 0.0
    %765 = vmatprep.subr.mxu0 0.0
    %766 = vmatpush2.msra.mxu0 0.0
    %767 = vmatprep.subr.mxu0 0.0
    %768 = vmatpush2.msra.mxu0 0.0
    %769 = vmatprep.subr.mxu0 0.0
    %770 = vmatpush2.msra.mxu0 0.0
    %771 = vmatprep.subr.mxu0 0.0
    %772 = vmatpush2.msra.mxu0 0.0
    %773 = vmatprep.subr.mxu0 0.0
    %774 = vmatpush2.msra.mxu0 0.0
    %775 = vmatprep.subr.mxu0 0.0
    %776 = vmatpush2.msra.mxu0 0.0
    %777 = vmatprep.subr.mxu0 0.0
    %778 = vmatpush2.msra.mxu0 0.0
    %779 = vmatprep.subr.mxu0 0.0
    %780 = vmatpush2.msra.mxu0 0.0
    %781 = vmatprep.subr.mxu0 0.0
    %782 = vmatpush2.msra.mxu0 0.0
    %783 = vmatprep.subr.mxu0 0.0
    %784 = vmatpush2.msra.mxu0 0.0
    %785 = vmatprep.subr.mxu0 0.0
    %786 = vmatpush2.msra.mxu0 0.0
    %787 = vmatprep.mubr.f32.mxu0 0.0
    %788 = vmatmul.mubr.f32.gmra.mxu0 %v641
    %v789 = vpop.f32.mrf.mxu0
    %v790 = vadd.f32 0.0, %v789
    %v791 = vpop.f32.mrf.mxu0
    %v792 = vadd.f32 0.0, %v791
    %793 = vmatprep.mubr.f32.mxu0 0.0
    %794 = vmatmul.mubr.f32.gmra.mxu0 %v644
    %v795 = vpop.f32.mrf.mxu0
    %v796 = vadd.f32 0.0, %v795
    %v797 = vpop.f32.mrf.mxu0
    %v798 = vadd.f32 0.0, %v797
    %799 = vdwg.mxu0
    %v800 = vadd.f32 %v521, %v713
    %v801 = vadd.f32 %v523, %v715
    %v802 = vadd.f32 %v598, %v790
    %v803 = vadd.f32 %v600, %v792
    %v804 = vadd.f32 %v527, %v719
    %v805 = vadd.f32 %v529, %v721
    %v806 = vadd.f32 %v604, %v796
    %v807 = vadd.f32 %v606, %v798
    %v808 = vld [vmem:[%s6] sm:$0xf]
    %v810 = vlaneseq
    %v811 = vshrl.u32 %v810, 7
    %v812 = vsub.s32 0, %v811
    %v813 = vrot.slane %v808, %v812
    %v814 = vlaneseq
    %v815 = vshrl.u32 %v814, 7
    %v816 = vsub.s32 1, %v815
    %v817 = vrot.slane %v808, %v816
    %v818 = vlaneseq
    %v819 = vshrl.u32 %v818, 7
    %v820 = vsub.s32 2, %v819
    %v821 = vrot.slane %v808, %v820
    %v822 = vlaneseq
    %v823 = vshrl.u32 %v822, 7
    %v824 = vsub.s32 3, %v823
    %v825 = vrot.slane %v808, %v824
    %v830 = vadd.f32 %v800, %v813
    %v831 = vadd.f32 %v801, %v817
    %v832 = vadd.f32 %v802, %v821
    %v833 = vadd.f32 %v803, %v825
    %v834 = vadd.f32 %v804, %v813
    %v835 = vadd.f32 %v805, %v817
    %v836 = vadd.f32 %v806, %v821
    %v837 = vadd.f32 %v807, %v825
    %838 = vst [vmem:[%s7] sm:$0xff] %v830
    %839 = vst [vmem:[%s7 + $0x8] sm:$0xff] %v831
    %840 = vst [vmem:[%s7 + $0x10] sm:$0xff] %v832
    %841 = vst [vmem:[%s7 + $0x18] sm:$0xff] %v833
    %842 = vst [vmem:[%s7 + $0x20] sm:$0xff] %v834
    %843 = vst [vmem:[%s7 + $0x28] sm:$0xff] %v835
    %844 = vst [vmem:[%s7 + $0x30] sm:$0xff] %v836
    %845 = vst [vmem:[%s7 + $0x38] sm:$0xff] %v837
    %s846 = scalar_lea.vmem %s0, 16
    %v847 = vld [vmem:[%s846] sm:$0xff]
    %v848 = vld [vmem:[%s846 + $0x8] sm:$0xff]
    %v849 = vld [vmem:[%s1] sm:$0xff]
    %v850 = vld [vmem:[%s1 + $0x8] sm:$0xff]
    %v852 = vsel %vm58, %v849, 0
    %v855 = vsel %vm58, %v850, 0
    %857 = vmatprep.subr.mxu0 0.0
    %858 = vmatpush1.msra.mxu0 0.0
    %859 = vmatprep.subr.mxu0 0.0
    %860 = vmatpush1.msra.mxu0 0.0
    %861 = vmatprep.subr.mxu0 0.0
    %862 = vmatpush1.msra.mxu0 0.0
    %863 = vmatprep.subr.mxu0 0.0
    %864 = vmatpush1.msra.mxu0 0.0
    %865 = vmatprep.subr.mxu0 0.0
    %866 = vmatpush1.msra.mxu0 0.0
    %867 = vmatprep.subr.mxu0 0.0
    %868 = vmatpush1.msra.mxu0 0.0
    %869 = vmatprep.subr.mxu0 0.0
    %870 = vmatpush1.msra.mxu0 0.0
    %871 = vmatprep.subr.mxu0 0.0
    %872 = vmatpush1.msra.mxu0 0.0
    %873 = vmatprep.subr.mxu0 0.0
    %874 = vmatpush1.msra.mxu0 0.0
    %875 = vmatprep.subr.mxu0 0.0
    %876 = vmatpush1.msra.mxu0 0.0
    %877 = vmatprep.subr.mxu0 0.0
    %878 = vmatpush1.msra.mxu0 0.0
    %879 = vmatprep.subr.mxu0 0.0
    %880 = vmatpush1.msra.mxu0 0.0
    %881 = vmatprep.subr.mxu0 0.0
    %882 = vmatpush1.msra.mxu0 0.0
    %883 = vmatprep.subr.mxu0 0.0
    %884 = vmatpush1.msra.mxu0 0.0
    %885 = vmatprep.subr.mxu0 0.0
    %886 = vmatpush1.msra.mxu0 %v848
    %887 = vmatprep.subr.mxu0 0.0
    %888 = vmatpush1.msra.mxu0 %v847
    %889 = vmatprep.subr.mxu0 0.0
    %890 = vmatpush2.msra.mxu0 0.0
    %891 = vmatprep.subr.mxu0 0.0
    %892 = vmatpush2.msra.mxu0 0.0
    %893 = vmatprep.subr.mxu0 0.0
    %894 = vmatpush2.msra.mxu0 0.0
    %895 = vmatprep.subr.mxu0 0.0
    %896 = vmatpush2.msra.mxu0 0.0
    %897 = vmatprep.subr.mxu0 0.0
    %898 = vmatpush2.msra.mxu0 0.0
    %899 = vmatprep.subr.mxu0 0.0
    %900 = vmatpush2.msra.mxu0 0.0
    %901 = vmatprep.subr.mxu0 0.0
    %902 = vmatpush2.msra.mxu0 0.0
    %903 = vmatprep.subr.mxu0 0.0
    %904 = vmatpush2.msra.mxu0 0.0
    %905 = vmatprep.subr.mxu0 0.0
    %906 = vmatpush2.msra.mxu0 0.0
    %907 = vmatprep.subr.mxu0 0.0
    %908 = vmatpush2.msra.mxu0 0.0
    %909 = vmatprep.subr.mxu0 0.0
    %910 = vmatpush2.msra.mxu0 0.0
    %911 = vmatprep.subr.mxu0 0.0
    %912 = vmatpush2.msra.mxu0 0.0
    %913 = vmatprep.subr.mxu0 0.0
    %914 = vmatpush2.msra.mxu0 0.0
    %915 = vmatprep.subr.mxu0 0.0
    %916 = vmatpush2.msra.mxu0 0.0
    %917 = vmatprep.subr.mxu0 0.0
    %918 = vmatpush2.msra.mxu0 0.0
    %919 = vmatprep.subr.mxu0 0.0
    %920 = vmatpush2.msra.mxu0 0.0
    %921 = vmatprep.mubr.f32.mxu0 0.0
    %922 = vmatmul.mubr.f32.gmra.mxu0 %v852
    %v923 = vpop.f32.mrf.mxu0
    %v924 = vadd.f32 0.0, %v923
    %v925 = vpop.f32.mrf.mxu0
    %926 = vmatprep.mubr.f32.mxu0 0.0
    %927 = vmatmul.mubr.f32.gmra.mxu0 %v855
    %v928 = vpop.f32.mrf.mxu0
    %v929 = vadd.f32 0.0, %v928
    %v930 = vpop.f32.mrf.mxu0
    %931 = vdwg.mxu0
    %v932 = vld [vmem:[%s2] sm:$0xff]
    %v933 = vld [vmem:[%s2 + $0x8] sm:$0xff]
    %v935 = vsel %vm58, %v932, 0
    %v938 = vsel %vm58, %v933, 0
    %940 = vmatprep.subr.mxu0 0.0
    %941 = vmatpush1.msra.mxu0 0.0
    %942 = vmatprep.subr.mxu0 0.0
    %943 = vmatpush1.msra.mxu0 0.0
    %944 = vmatprep.subr.mxu0 0.0
    %945 = vmatpush1.msra.mxu0 0.0
    %946 = vmatprep.subr.mxu0 0.0
    %947 = vmatpush1.msra.mxu0 0.0
    %948 = vmatprep.subr.mxu0 0.0
    %949 = vmatpush1.msra.mxu0 0.0
    %950 = vmatprep.subr.mxu0 0.0
    %951 = vmatpush1.msra.mxu0 0.0
    %952 = vmatprep.subr.mxu0 0.0
    %953 = vmatpush1.msra.mxu0 0.0
    %954 = vmatprep.subr.mxu0 0.0
    %955 = vmatpush1.msra.mxu0 0.0
    %956 = vmatprep.subr.mxu0 0.0
    %957 = vmatpush1.msra.mxu0 0.0
    %958 = vmatprep.subr.mxu0 0.0
    %959 = vmatpush1.msra.mxu0 0.0
    %960 = vmatprep.subr.mxu0 0.0
    %961 = vmatpush1.msra.mxu0 0.0
    %962 = vmatprep.subr.mxu0 0.0
    %963 = vmatpush1.msra.mxu0 0.0
    %964 = vmatprep.subr.mxu0 0.0
    %965 = vmatpush1.msra.mxu0 0.0
    %966 = vmatprep.subr.mxu0 0.0
    %967 = vmatpush1.msra.mxu0 0.0
    %968 = vmatprep.subr.mxu0 0.0
    %969 = vmatpush1.msra.mxu0 %v848
    %970 = vmatprep.subr.mxu0 0.0
    %971 = vmatpush1.msra.mxu0 %v847
    %972 = vmatprep.subr.mxu0 0.0
    %973 = vmatpush2.msra.mxu0 0.0
    %974 = vmatprep.subr.mxu0 0.0
    %975 = vmatpush2.msra.mxu0 0.0
    %976 = vmatprep.subr.mxu0 0.0
    %977 = vmatpush2.msra.mxu0 0.0
    %978 = vmatprep.subr.mxu0 0.0
    %979 = vmatpush2.msra.mxu0 0.0
    %980 = vmatprep.subr.mxu0 0.0
    %981 = vmatpush2.msra.mxu0 0.0
    %982 = vmatprep.subr.mxu0 0.0
    %983 = vmatpush2.msra.mxu0 0.0
    %984 = vmatprep.subr.mxu0 0.0
    %985 = vmatpush2.msra.mxu0 0.0
    %986 = vmatprep.subr.mxu0 0.0
    %987 = vmatpush2.msra.mxu0 0.0
    %988 = vmatprep.subr.mxu0 0.0
    %989 = vmatpush2.msra.mxu0 0.0
    %990 = vmatprep.subr.mxu0 0.0
    %991 = vmatpush2.msra.mxu0 0.0
    %992 = vmatprep.subr.mxu0 0.0
    %993 = vmatpush2.msra.mxu0 0.0
    %994 = vmatprep.subr.mxu0 0.0
    %995 = vmatpush2.msra.mxu0 0.0
    %996 = vmatprep.subr.mxu0 0.0
    %997 = vmatpush2.msra.mxu0 0.0
    %998 = vmatprep.subr.mxu0 0.0
    %999 = vmatpush2.msra.mxu0 0.0
    %1000 = vmatprep.subr.mxu0 0.0
    %1001 = vmatpush2.msra.mxu0 0.0
    %1002 = vmatprep.subr.mxu0 0.0
    %1003 = vmatpush2.msra.mxu0 0.0
    %1004 = vmatprep.mubr.f32.mxu0 0.0
    %1005 = vmatmul.mubr.f32.gmra.mxu0 %v935
    %v1006 = vpop.f32.mrf.mxu0
    %v1007 = vadd.f32 0.0, %v1006
    %v1008 = vpop.f32.mrf.mxu0
    %1009 = vmatprep.mubr.f32.mxu0 0.0
    %1010 = vmatmul.mubr.f32.gmra.mxu0 %v938
    %v1011 = vpop.f32.mrf.mxu0
    %v1012 = vadd.f32 0.0, %v1011
    %v1013 = vpop.f32.mrf.mxu0
    %1014 = vdwg.mxu0
    %v1015 = vld [vmem:[%s3] sm:$0xff]
    %v1016 = vld [vmem:[%s3 + $0x8] sm:$0xff]
    %v1017 = vld [vmem:[%s3 + $0x10] sm:$0xff]
    %v1018 = vld [vmem:[%s3 + $0x18] sm:$0xff]
    %v1019 = vld [vmem:[%s3 + $0x20] sm:$0xff]
    %v1020 = vld [vmem:[%s3 + $0x28] sm:$0xff]
    %v1021 = vld [vmem:[%s3 + $0x30] sm:$0xff]
    %v1022 = vld [vmem:[%s3 + $0x38] sm:$0xff]
    %v1023 = vld [vmem:[%s3 + $0x40] sm:$0xff]
    %v1024 = vld [vmem:[%s3 + $0x48] sm:$0xff]
    %v1025 = vld [vmem:[%s3 + $0x50] sm:$0xff]
    %v1026 = vld [vmem:[%s3 + $0x58] sm:$0xff]
    %v1027 = vld [vmem:[%s3 + $0x60] sm:$0xff]
    %v1028 = vld [vmem:[%s3 + $0x68] sm:$0xff]
    %v1029 = vld [vmem:[%s3 + $0x70] sm:$0xff]
    %v1030 = vld [vmem:[%s3 + $0x78] sm:$0xff]
    %v1031 = vld [vmem:[%s3 + $0x80] sm:$0xff]
    %v1032 = vld [vmem:[%s3 + $0x88] sm:$0xff]
    %v1033 = vld [vmem:[%s3 + $0x90] sm:$0xff]
    %v1034 = vld [vmem:[%s3 + $0x98] sm:$0xff]
    %v1035 = vld [vmem:[%s3 + $0xa0] sm:$0xff]
    %v1036 = vld [vmem:[%s3 + $0xa8] sm:$0xff]
    %v1037 = vld [vmem:[%s3 + $0xb0] sm:$0xff]
    %v1038 = vld [vmem:[%s3 + $0xb8] sm:$0xff]
    %v1039 = vld [vmem:[%s3 + $0xc0] sm:$0xff]
    %v1040 = vld [vmem:[%s3 + $0xc8] sm:$0xff]
    %v1041 = vld [vmem:[%s3 + $0xd0] sm:$0xff]
    %v1042 = vld [vmem:[%s3 + $0xd8] sm:$0xff]
    %v1043 = vld [vmem:[%s3 + $0xe0] sm:$0xff]
    %v1044 = vld [vmem:[%s3 + $0xe8] sm:$0xff]
    %v1045 = vld [vmem:[%s3 + $0xf0] sm:$0xff]
    %v1046 = vld [vmem:[%s3 + $0xf8] sm:$0xff]
    %v1047 = vld [vmem:[#allocation2] sm:$0xff]
    %v1048 = vld [vmem:[#allocation2 + $0x8] sm:$0xff]
    %v1049 = vld [vmem:[#allocation2 + $0x10] sm:$0xff]
    %v1050 = vld [vmem:[#allocation2 + $0x18] sm:$0xff]
    %v1051 = vld [vmem:[#allocation2 + $0x20] sm:$0xff]
    %v1052 = vld [vmem:[#allocation2 + $0x28] sm:$0xff]
    %v1053 = vld [vmem:[#allocation2 + $0x30] sm:$0xff]
    %v1054 = vld [vmem:[#allocation2 + $0x38] sm:$0xff]
    %v1055 = vld [vmem:[#allocation2 + $0x40] sm:$0xff]
    %v1056 = vld [vmem:[#allocation2 + $0x48] sm:$0xff]
    %v1057 = vld [vmem:[#allocation2 + $0x50] sm:$0xff]
    %v1058 = vld [vmem:[#allocation2 + $0x58] sm:$0xff]
    %v1059 = vld [vmem:[#allocation2 + $0x60] sm:$0xff]
    %v1060 = vld [vmem:[#allocation2 + $0x68] sm:$0xff]
    %v1061 = vld [vmem:[#allocation2 + $0x70] sm:$0xff]
    %v1062 = vld [vmem:[#allocation2 + $0x78] sm:$0xff]
    %v1063 = vld [vmem:[#allocation2 + $0x80] sm:$0xff]
    %v1064 = vld [vmem:[#allocation2 + $0x88] sm:$0xff]
    %v1065 = vld [vmem:[#allocation2 + $0x90] sm:$0xff]
    %v1066 = vld [vmem:[#allocation2 + $0x98] sm:$0xff]
    %v1067 = vld [vmem:[#allocation2 + $0xa0] sm:$0xff]
    %v1068 = vld [vmem:[#allocation2 + $0xa8] sm:$0xff]
    %v1069 = vld [vmem:[#allocation2 + $0xb0] sm:$0xff]
    %v1070 = vld [vmem:[#allocation2 + $0xb8] sm:$0xff]
    %v1071 = vld [vmem:[#allocation2 + $0xc0] sm:$0xff]
    %v1072 = vld [vmem:[#allocation2 + $0xc8] sm:$0xff]
    %v1073 = vld [vmem:[#allocation2 + $0xd0] sm:$0xff]
    %v1074 = vld [vmem:[#allocation2 + $0xd8] sm:$0xff]
    %v1075 = vld [vmem:[#allocation2 + $0xe0] sm:$0xff]
    %v1076 = vld [vmem:[#allocation2 + $0xe8] sm:$0xff]
    %v1077 = vld [vmem:[#allocation2 + $0xf0] sm:$0xff]
    %v1078 = vld [vmem:[#allocation2 + $0xf8] sm:$0xff]
    %v1080 = vsel %vm287, %v924, 0
    %v1083 = vsel %vm287, %v929, 0
    %1085 = vmatprep.subr.mxu0 0.0
    %1086 = vmatpush1.msra.mxu0 0.0
    %1087 = vmatprep.subr.mxu0 0.0
    %1088 = vmatpush1.msra.mxu0 0.0
    %1089 = vmatprep.subr.mxu0 0.0
    %1090 = vmatpush1.msra.mxu0 0.0
    %1091 = vmatprep.subr.mxu0 0.0
    %1092 = vmatpush1.msra.mxu0 0.0
    %1093 = vmatprep.subr.mxu0 0.0
    %1094 = vmatpush1.msra.mxu0 0.0
    %1095 = vmatprep.subr.mxu0 0.0
    %1096 = vmatpush1.msra.mxu0 0.0
    %1097 = vmatprep.subr.mxu0 0.0
    %1098 = vmatpush1.msra.mxu0 0.0
    %1099 = vmatprep.subr.mxu0 0.0
    %1100 = vmatpush1.msra.mxu0 0.0
    %1101 = vmatprep.subr.mxu0 %v1076
    %1102 = vmatpush1.msra.mxu0 %v1075
    %1103 = vmatprep.subr.mxu0 %v1072
    %1104 = vmatpush1.msra.mxu0 %v1071
    %1105 = vmatprep.subr.mxu0 %v1068
    %1106 = vmatpush1.msra.mxu0 %v1067
    %1107 = vmatprep.subr.mxu0 %v1064
    %1108 = vmatpush1.msra.mxu0 %v1063
    %1109 = vmatprep.subr.mxu0 %v1060
    %1110 = vmatpush1.msra.mxu0 %v1059
    %1111 = vmatprep.subr.mxu0 %v1056
    %1112 = vmatpush1.msra.mxu0 %v1055
    %1113 = vmatprep.subr.mxu0 %v1052
    %1114 = vmatpush1.msra.mxu0 %v1051
    %1115 = vmatprep.subr.mxu0 %v1048
    %1116 = vmatpush1.msra.mxu0 %v1047
    %1117 = vmatprep.subr.mxu0 0.0
    %1118 = vmatpush2.msra.mxu0 0.0
    %1119 = vmatprep.subr.mxu0 0.0
    %1120 = vmatpush2.msra.mxu0 0.0
    %1121 = vmatprep.subr.mxu0 0.0
    %1122 = vmatpush2.msra.mxu0 0.0
    %1123 = vmatprep.subr.mxu0 0.0
    %1124 = vmatpush2.msra.mxu0 0.0
    %1125 = vmatprep.subr.mxu0 0.0
    %1126 = vmatpush2.msra.mxu0 0.0
    %1127 = vmatprep.subr.mxu0 0.0
    %1128 = vmatpush2.msra.mxu0 0.0
    %1129 = vmatprep.subr.mxu0 0.0
    %1130 = vmatpush2.msra.mxu0 0.0
    %1131 = vmatprep.subr.mxu0 0.0
    %1132 = vmatpush2.msra.mxu0 0.0
    %1133 = vmatprep.subr.mxu0 0.0
    %1134 = vmatpush2.msra.mxu0 0.0
    %1135 = vmatprep.subr.mxu0 0.0
    %1136 = vmatpush2.msra.mxu0 0.0
    %1137 = vmatprep.subr.mxu0 0.0
    %1138 = vmatpush2.msra.mxu0 0.0
    %1139 = vmatprep.subr.mxu0 0.0
    %1140 = vmatpush2.msra.mxu0 0.0
    %1141 = vmatprep.subr.mxu0 0.0
    %1142 = vmatpush2.msra.mxu0 0.0
    %1143 = vmatprep.subr.mxu0 0.0
    %1144 = vmatpush2.msra.mxu0 0.0
    %1145 = vmatprep.subr.mxu0 0.0
    %1146 = vmatpush2.msra.mxu0 0.0
    %1147 = vmatprep.subr.mxu0 0.0
    %1148 = vmatpush2.msra.mxu0 0.0
    %1149 = vmatprep.mubr.f32.mxu0 0.0
    %1150 = vmatmul.mubr.f32.gmra.mxu0 %v1080
    %v1151 = vpop.f32.mrf.mxu0
    %v1152 = vadd.f32 0.0, %v1151
    %v1153 = vpop.f32.mrf.mxu0
    %v1154 = vadd.f32 0.0, %v1153
    %1155 = vmatprep.mubr.f32.mxu0 0.0
    %1156 = vmatmul.mubr.f32.gmra.mxu0 %v1083
    %v1157 = vpop.f32.mrf.mxu0
    %v1158 = vadd.f32 0.0, %v1157
    %v1159 = vpop.f32.mrf.mxu0
    %v1160 = vadd.f32 0.0, %v1159
    %1161 = vdwg.mxu0
    %1162 = vmatprep.subr.mxu0 0.0
    %1163 = vmatpush1.msra.mxu0 0.0
    %1164 = vmatprep.subr.mxu0 0.0
    %1165 = vmatpush1.msra.mxu0 0.0
    %1166 = vmatprep.subr.mxu0 0.0
    %1167 = vmatpush1.msra.mxu0 0.0
    %1168 = vmatprep.subr.mxu0 0.0
    %1169 = vmatpush1.msra.mxu0 0.0
    %1170 = vmatprep.subr.mxu0 0.0
    %1171 = vmatpush1.msra.mxu0 0.0
    %1172 = vmatprep.subr.mxu0 0.0
    %1173 = vmatpush1.msra.mxu0 0.0
    %1174 = vmatprep.subr.mxu0 0.0
    %1175 = vmatpush1.msra.mxu0 0.0
    %1176 = vmatprep.subr.mxu0 0.0
    %1177 = vmatpush1.msra.mxu0 0.0
    %1178 = vmatprep.subr.mxu0 %v1078
    %1179 = vmatpush1.msra.mxu0 %v1077
    %1180 = vmatprep.subr.mxu0 %v1074
    %1181 = vmatpush1.msra.mxu0 %v1073
    %1182 = vmatprep.subr.mxu0 %v1070
    %1183 = vmatpush1.msra.mxu0 %v1069
    %1184 = vmatprep.subr.mxu0 %v1066
    %1185 = vmatpush1.msra.mxu0 %v1065
    %1186 = vmatprep.subr.mxu0 %v1062
    %1187 = vmatpush1.msra.mxu0 %v1061
    %1188 = vmatprep.subr.mxu0 %v1058
    %1189 = vmatpush1.msra.mxu0 %v1057
    %1190 = vmatprep.subr.mxu0 %v1054
    %1191 = vmatpush1.msra.mxu0 %v1053
    %1192 = vmatprep.subr.mxu0 %v1050
    %1193 = vmatpush1.msra.mxu0 %v1049
    %1194 = vmatprep.subr.mxu0 0.0
    %1195 = vmatpush2.msra.mxu0 0.0
    %1196 = vmatprep.subr.mxu0 0.0
    %1197 = vmatpush2.msra.mxu0 0.0
    %1198 = vmatprep.subr.mxu0 0.0
    %1199 = vmatpush2.msra.mxu0 0.0
    %1200 = vmatprep.subr.mxu0 0.0
    %1201 = vmatpush2.msra.mxu0 0.0
    %1202 = vmatprep.subr.mxu0 0.0
    %1203 = vmatpush2.msra.mxu0 0.0
    %1204 = vmatprep.subr.mxu0 0.0
    %1205 = vmatpush2.msra.mxu0 0.0
    %1206 = vmatprep.subr.mxu0 0.0
    %1207 = vmatpush2.msra.mxu0 0.0
    %1208 = vmatprep.subr.mxu0 0.0
    %1209 = vmatpush2.msra.mxu0 0.0
    %1210 = vmatprep.subr.mxu0 0.0
    %1211 = vmatpush2.msra.mxu0 0.0
    %1212 = vmatprep.subr.mxu0 0.0
    %1213 = vmatpush2.msra.mxu0 0.0
    %1214 = vmatprep.subr.mxu0 0.0
    %1215 = vmatpush2.msra.mxu0 0.0
    %1216 = vmatprep.subr.mxu0 0.0
    %1217 = vmatpush2.msra.mxu0 0.0
    %1218 = vmatprep.subr.mxu0 0.0
    %1219 = vmatpush2.msra.mxu0 0.0
    %1220 = vmatprep.subr.mxu0 0.0
    %1221 = vmatpush2.msra.mxu0 0.0
    %1222 = vmatprep.subr.mxu0 0.0
    %1223 = vmatpush2.msra.mxu0 0.0
    %1224 = vmatprep.subr.mxu0 0.0
    %1225 = vmatpush2.msra.mxu0 0.0
    %1226 = vmatprep.mubr.f32.mxu0 0.0
    %1227 = vmatmul.mubr.f32.gmra.mxu0 %v1080
    %v1228 = vpop.f32.mrf.mxu0
    %v1229 = vadd.f32 0.0, %v1228
    %v1230 = vpop.f32.mrf.mxu0
    %v1231 = vadd.f32 0.0, %v1230
    %1232 = vmatprep.mubr.f32.mxu0 0.0
    %1233 = vmatmul.mubr.f32.gmra.mxu0 %v1083
    %v1234 = vpop.f32.mrf.mxu0
    %v1235 = vadd.f32 0.0, %v1234
    %v1236 = vpop.f32.mrf.mxu0
    %v1237 = vadd.f32 0.0, %v1236
    %1238 = vdwg.mxu0
    %v1240 = vsel %vm287, %v847, 0
    %v1243 = vsel %vm287, %v848, 0
    %1245 = vmatprep.subr.mxu0 0.0
    %1246 = vmatpush1.msra.mxu0 0.0
    %1247 = vmatprep.subr.mxu0 0.0
    %1248 = vmatpush1.msra.mxu0 0.0
    %1249 = vmatprep.subr.mxu0 0.0
    %1250 = vmatpush1.msra.mxu0 0.0
    %1251 = vmatprep.subr.mxu0 0.0
    %1252 = vmatpush1.msra.mxu0 0.0
    %1253 = vmatprep.subr.mxu0 0.0
    %1254 = vmatpush1.msra.mxu0 0.0
    %1255 = vmatprep.subr.mxu0 0.0
    %1256 = vmatpush1.msra.mxu0 0.0
    %1257 = vmatprep.subr.mxu0 0.0
    %1258 = vmatpush1.msra.mxu0 0.0
    %1259 = vmatprep.subr.mxu0 0.0
    %1260 = vmatpush1.msra.mxu0 0.0
    %1261 = vmatprep.subr.mxu0 %v1044
    %1262 = vmatpush1.msra.mxu0 %v1043
    %1263 = vmatprep.subr.mxu0 %v1040
    %1264 = vmatpush1.msra.mxu0 %v1039
    %1265 = vmatprep.subr.mxu0 %v1036
    %1266 = vmatpush1.msra.mxu0 %v1035
    %1267 = vmatprep.subr.mxu0 %v1032
    %1268 = vmatpush1.msra.mxu0 %v1031
    %1269 = vmatprep.subr.mxu0 %v1028
    %1270 = vmatpush1.msra.mxu0 %v1027
    %1271 = vmatprep.subr.mxu0 %v1024
    %1272 = vmatpush1.msra.mxu0 %v1023
    %1273 = vmatprep.subr.mxu0 %v1020
    %1274 = vmatpush1.msra.mxu0 %v1019
    %1275 = vmatprep.subr.mxu0 %v1016
    %1276 = vmatpush1.msra.mxu0 %v1015
    %1277 = vmatprep.subr.mxu0 0.0
    %1278 = vmatpush2.msra.mxu0 0.0
    %1279 = vmatprep.subr.mxu0 0.0
    %1280 = vmatpush2.msra.mxu0 0.0
    %1281 = vmatprep.subr.mxu0 0.0
    %1282 = vmatpush2.msra.mxu0 0.0
    %1283 = vmatprep.subr.mxu0 0.0
    %1284 = vmatpush2.msra.mxu0 0.0
    %1285 = vmatprep.subr.mxu0 0.0
    %1286 = vmatpush2.msra.mxu0 0.0
    %1287 = vmatprep.subr.mxu0 0.0
    %1288 = vmatpush2.msra.mxu0 0.0
    %1289 = vmatprep.subr.mxu0 0.0
    %1290 = vmatpush2.msra.mxu0 0.0
    %1291 = vmatprep.subr.mxu0 0.0
    %1292 = vmatpush2.msra.mxu0 0.0
    %1293 = vmatprep.subr.mxu0 0.0
    %1294 = vmatpush2.msra.mxu0 0.0
    %1295 = vmatprep.subr.mxu0 0.0
    %1296 = vmatpush2.msra.mxu0 0.0
    %1297 = vmatprep.subr.mxu0 0.0
    %1298 = vmatpush2.msra.mxu0 0.0
    %1299 = vmatprep.subr.mxu0 0.0
    %1300 = vmatpush2.msra.mxu0 0.0
    %1301 = vmatprep.subr.mxu0 0.0
    %1302 = vmatpush2.msra.mxu0 0.0
    %1303 = vmatprep.subr.mxu0 0.0
    %1304 = vmatpush2.msra.mxu0 0.0
    %1305 = vmatprep.subr.mxu0 0.0
    %1306 = vmatpush2.msra.mxu0 0.0
    %1307 = vmatprep.subr.mxu0 0.0
    %1308 = vmatpush2.msra.mxu0 0.0
    %1309 = vmatprep.mubr.f32.mxu0 0.0
    %1310 = vmatmul.mubr.f32.gmra.mxu0 %v1240
    %v1311 = vpop.f32.mrf.mxu0
    %v1312 = vadd.f32 %v1152, %v1311
    %v1313 = vpop.f32.mrf.mxu0
    %v1314 = vadd.f32 %v1154, %v1313
    %1315 = vmatprep.mubr.f32.mxu0 0.0
    %1316 = vmatmul.mubr.f32.gmra.mxu0 %v1243
    %v1317 = vpop.f32.mrf.mxu0
    %v1318 = vadd.f32 %v1158, %v1317
    %v1319 = vpop.f32.mrf.mxu0
    %v1320 = vadd.f32 %v1160, %v1319
    %1321 = vdwg.mxu0
    %1322 = vmatprep.subr.mxu0 0.0
    %1323 = vmatpush1.msra.mxu0 0.0
    %1324 = vmatprep.subr.mxu0 0.0
    %1325 = vmatpush1.msra.mxu0 0.0
    %1326 = vmatprep.subr.mxu0 0.0
    %1327 = vmatpush1.msra.mxu0 0.0
    %1328 = vmatprep.subr.mxu0 0.0
    %1329 = vmatpush1.msra.mxu0 0.0
    %1330 = vmatprep.subr.mxu0 0.0
    %1331 = vmatpush1.msra.mxu0 0.0
    %1332 = vmatprep.subr.mxu0 0.0
    %1333 = vmatpush1.msra.mxu0 0.0
    %1334 = vmatprep.subr.mxu0 0.0
    %1335 = vmatpush1.msra.mxu0 0.0
    %1336 = vmatprep.subr.mxu0 0.0
    %1337 = vmatpush1.msra.mxu0 0.0
    %1338 = vmatprep.subr.mxu0 %v1046
    %1339 = vmatpush1.msra.mxu0 %v1045
    %1340 = vmatprep.subr.mxu0 %v1042
    %1341 = vmatpush1.msra.mxu0 %v1041
    %1342 = vmatprep.subr.mxu0 %v1038
    %1343 = vmatpush1.msra.mxu0 %v1037
    %1344 = vmatprep.subr.mxu0 %v1034
    %1345 = vmatpush1.msra.mxu0 %v1033
    %1346 = vmatprep.subr.mxu0 %v1030
    %1347 = vmatpush1.msra.mxu0 %v1029
    %1348 = vmatprep.subr.mxu0 %v1026
    %1349 = vmatpush1.msra.mxu0 %v1025
    %1350 = vmatprep.subr.mxu0 %v1022
    %1351 = vmatpush1.msra.mxu0 %v1021
    %1352 = vmatprep.subr.mxu0 %v1018
    %1353 = vmatpush1.msra.mxu0 %v1017
    %1354 = vmatprep.subr.mxu0 0.0
    %1355 = vmatpush2.msra.mxu0 0.0
    %1356 = vmatprep.subr.mxu0 0.0
    %1357 = vmatpush2.msra.mxu0 0.0
    %1358 = vmatprep.subr.mxu0 0.0
    %1359 = vmatpush2.msra.mxu0 0.0
    %1360 = vmatprep.subr.mxu0 0.0
    %1361 = vmatpush2.msra.mxu0 0.0
    %1362 = vmatprep.subr.mxu0 0.0
    %1363 = vmatpush2.msra.mxu0 0.0
    %1364 = vmatprep.subr.mxu0 0.0
    %1365 = vmatpush2.msra.mxu0 0.0
    %1366 = vmatprep.subr.mxu0 0.0
    %1367 = vmatpush2.msra.mxu0 0.0
    %1368 = vmatprep.subr.mxu0 0.0
    %1369 = vmatpush2.msra.mxu0 0.0
    %1370 = vmatprep.subr.mxu0 0.0
    %1371 = vmatpush2.msra.mxu0 0.0
    %1372 = vmatprep.subr.mxu0 0.0
    %1373 = vmatpush2.msra.mxu0 0.0
    %1374 = vmatprep.subr.mxu0 0.0
    %1375 = vmatpush2.msra.mxu0 0.0
    %1376 = vmatprep.subr.mxu0 0.0
    %1377 = vmatpush2.msra.mxu0 0.0
    %1378 = vmatprep.subr.mxu0 0.0
    %1379 = vmatpush2.msra.mxu0 0.0
    %1380 = vmatprep.subr.mxu0 0.0
    %1381 = vmatpush2.msra.mxu0 0.0
    %1382 = vmatprep.subr.mxu0 0.0
    %1383 = vmatpush2.msra.mxu0 0.0
    %1384 = vmatprep.subr.mxu0 0.0
    %1385 = vmatpush2.msra.mxu0 0.0
    %1386 = vmatprep.mubr.f32.mxu0 0.0
    %1387 = vmatmul.mubr.f32.gmra.mxu0 %v1240
    %v1388 = vpop.f32.mrf.mxu0
    %v1389 = vadd.f32 %v1229, %v1388
    %v1390 = vpop.f32.mrf.mxu0
    %v1391 = vadd.f32 %v1231, %v1390
    %1392 = vmatprep.mubr.f32.mxu0 0.0
    %1393 = vmatmul.mubr.f32.gmra.mxu0 %v1243
    %v1394 = vpop.f32.mrf.mxu0
    %v1395 = vadd.f32 %v1235, %v1394
    %v1396 = vpop.f32.mrf.mxu0
    %v1397 = vadd.f32 %v1237, %v1396
    %1398 = vdwg.mxu0
    %v1399 = vld [vmem:[#allocation4] sm:$0xff]
    %v1400 = vld [vmem:[#allocation4 + $0x8] sm:$0xff]
    %v1401 = vld [vmem:[#allocation4 + $0x10] sm:$0xff]
    %v1402 = vld [vmem:[#allocation4 + $0x18] sm:$0xff]
    %v1403 = vld [vmem:[#allocation4 + $0x20] sm:$0xff]
    %v1404 = vld [vmem:[#allocation4 + $0x28] sm:$0xff]
    %v1405 = vld [vmem:[#allocation4 + $0x30] sm:$0xff]
    %v1406 = vld [vmem:[#allocation4 + $0x38] sm:$0xff]
    %v1407 = vld [vmem:[#allocation4 + $0x40] sm:$0xff]
    %v1408 = vld [vmem:[#allocation4 + $0x48] sm:$0xff]
    %v1409 = vld [vmem:[#allocation4 + $0x50] sm:$0xff]
    %v1410 = vld [vmem:[#allocation4 + $0x58] sm:$0xff]
    %v1411 = vld [vmem:[#allocation4 + $0x60] sm:$0xff]
    %v1412 = vld [vmem:[#allocation4 + $0x68] sm:$0xff]
    %v1413 = vld [vmem:[#allocation4 + $0x70] sm:$0xff]
    %v1414 = vld [vmem:[#allocation4 + $0x78] sm:$0xff]
    %v1415 = vld [vmem:[#allocation4 + $0x80] sm:$0xff]
    %v1416 = vld [vmem:[#allocation4 + $0x88] sm:$0xff]
    %v1417 = vld [vmem:[#allocation4 + $0x90] sm:$0xff]
    %v1418 = vld [vmem:[#allocation4 + $0x98] sm:$0xff]
    %v1419 = vld [vmem:[#allocation4 + $0xa0] sm:$0xff]
    %v1420 = vld [vmem:[#allocation4 + $0xa8] sm:$0xff]
    %v1421 = vld [vmem:[#allocation4 + $0xb0] sm:$0xff]
    %v1422 = vld [vmem:[#allocation4 + $0xb8] sm:$0xff]
    %v1423 = vld [vmem:[#allocation4 + $0xc0] sm:$0xff]
    %v1424 = vld [vmem:[#allocation4 + $0xc8] sm:$0xff]
    %v1425 = vld [vmem:[#allocation4 + $0xd0] sm:$0xff]
    %v1426 = vld [vmem:[#allocation4 + $0xd8] sm:$0xff]
    %v1427 = vld [vmem:[#allocation4 + $0xe0] sm:$0xff]
    %v1428 = vld [vmem:[#allocation4 + $0xe8] sm:$0xff]
    %v1429 = vld [vmem:[#allocation4 + $0xf0] sm:$0xff]
    %v1430 = vld [vmem:[#allocation4 + $0xf8] sm:$0xff]
    %v1432 = vsel %vm287, %v1007, 0
    %v1435 = vsel %vm287, %v1012, 0
    %1437 = vmatprep.subr.mxu0 0.0
    %1438 = vmatpush1.msra.mxu0 0.0
    %1439 = vmatprep.subr.mxu0 0.0
    %1440 = vmatpush1.msra.mxu0 0.0
    %1441 = vmatprep.subr.mxu0 0.0
    %1442 = vmatpush1.msra.mxu0 0.0
    %1443 = vmatprep.subr.mxu0 0.0
    %1444 = vmatpush1.msra.mxu0 0.0
    %1445 = vmatprep.subr.mxu0 0.0
    %1446 = vmatpush1.msra.mxu0 0.0
    %1447 = vmatprep.subr.mxu0 0.0
    %1448 = vmatpush1.msra.mxu0 0.0
    %1449 = vmatprep.subr.mxu0 0.0
    %1450 = vmatpush1.msra.mxu0 0.0
    %1451 = vmatprep.subr.mxu0 0.0
    %1452 = vmatpush1.msra.mxu0 0.0
    %1453 = vmatprep.subr.mxu0 %v1428
    %1454 = vmatpush1.msra.mxu0 %v1427
    %1455 = vmatprep.subr.mxu0 %v1424
    %1456 = vmatpush1.msra.mxu0 %v1423
    %1457 = vmatprep.subr.mxu0 %v1420
    %1458 = vmatpush1.msra.mxu0 %v1419
    %1459 = vmatprep.subr.mxu0 %v1416
    %1460 = vmatpush1.msra.mxu0 %v1415
    %1461 = vmatprep.subr.mxu0 %v1412
    %1462 = vmatpush1.msra.mxu0 %v1411
    %1463 = vmatprep.subr.mxu0 %v1408
    %1464 = vmatpush1.msra.mxu0 %v1407
    %1465 = vmatprep.subr.mxu0 %v1404
    %1466 = vmatpush1.msra.mxu0 %v1403
    %1467 = vmatprep.subr.mxu0 %v1400
    %1468 = vmatpush1.msra.mxu0 %v1399
    %1469 = vmatprep.subr.mxu0 0.0
    %1470 = vmatpush2.msra.mxu0 0.0
    %1471 = vmatprep.subr.mxu0 0.0
    %1472 = vmatpush2.msra.mxu0 0.0
    %1473 = vmatprep.subr.mxu0 0.0
    %1474 = vmatpush2.msra.mxu0 0.0
    %1475 = vmatprep.subr.mxu0 0.0
    %1476 = vmatpush2.msra.mxu0 0.0
    %1477 = vmatprep.subr.mxu0 0.0
    %1478 = vmatpush2.msra.mxu0 0.0
    %1479 = vmatprep.subr.mxu0 0.0
    %1480 = vmatpush2.msra.mxu0 0.0
    %1481 = vmatprep.subr.mxu0 0.0
    %1482 = vmatpush2.msra.mxu0 0.0
    %1483 = vmatprep.subr.mxu0 0.0
    %1484 = vmatpush2.msra.mxu0 0.0
    %1485 = vmatprep.subr.mxu0 0.0
    %1486 = vmatpush2.msra.mxu0 0.0
    %1487 = vmatprep.subr.mxu0 0.0
    %1488 = vmatpush2.msra.mxu0 0.0
    %1489 = vmatprep.subr.mxu0 0.0
    %1490 = vmatpush2.msra.mxu0 0.0
    %1491 = vmatprep.subr.mxu0 0.0
    %1492 = vmatpush2.msra.mxu0 0.0
    %1493 = vmatprep.subr.mxu0 0.0
    %1494 = vmatpush2.msra.mxu0 0.0
    %1495 = vmatprep.subr.mxu0 0.0
    %1496 = vmatpush2.msra.mxu0 0.0
    %1497 = vmatprep.subr.mxu0 0.0
    %1498 = vmatpush2.msra.mxu0 0.0
    %1499 = vmatprep.subr.mxu0 0.0
    %1500 = vmatpush2.msra.mxu0 0.0
    %1501 = vmatprep.mubr.f32.mxu0 0.0
    %1502 = vmatmul.mubr.f32.gmra.mxu0 %v1432
    %v1503 = vpop.f32.mrf.mxu0
    %v1504 = vadd.f32 0.0, %v1503
    %v1505 = vpop.f32.mrf.mxu0
    %v1506 = vadd.f32 0.0, %v1505
    %1507 = vmatprep.mubr.f32.mxu0 0.0
    %1508 = vmatmul.mubr.f32.gmra.mxu0 %v1435
    %v1509 = vpop.f32.mrf.mxu0
    %v1510 = vadd.f32 0.0, %v1509
    %v1511 = vpop.f32.mrf.mxu0
    %v1512 = vadd.f32 0.0, %v1511
    %1513 = vdwg.mxu0
    %1514 = vmatprep.subr.mxu0 0.0
    %1515 = vmatpush1.msra.mxu0 0.0
    %1516 = vmatprep.subr.mxu0 0.0
    %1517 = vmatpush1.msra.mxu0 0.0
    %1518 = vmatprep.subr.mxu0 0.0
    %1519 = vmatpush1.msra.mxu0 0.0
    %1520 = vmatprep.subr.mxu0 0.0
    %1521 = vmatpush1.msra.mxu0 0.0
    %1522 = vmatprep.subr.mxu0 0.0
    %1523 = vmatpush1.msra.mxu0 0.0
    %1524 = vmatprep.subr.mxu0 0.0
    %1525 = vmatpush1.msra.mxu0 0.0
    %1526 = vmatprep.subr.mxu0 0.0
    %1527 = vmatpush1.msra.mxu0 0.0
    %1528 = vmatprep.subr.mxu0 0.0
    %1529 = vmatpush1.msra.mxu0 0.0
    %1530 = vmatprep.subr.mxu0 %v1430
    %1531 = vmatpush1.msra.mxu0 %v1429
    %1532 = vmatprep.subr.mxu0 %v1426
    %1533 = vmatpush1.msra.mxu0 %v1425
    %1534 = vmatprep.subr.mxu0 %v1422
    %1535 = vmatpush1.msra.mxu0 %v1421
    %1536 = vmatprep.subr.mxu0 %v1418
    %1537 = vmatpush1.msra.mxu0 %v1417
    %1538 = vmatprep.subr.mxu0 %v1414
    %1539 = vmatpush1.msra.mxu0 %v1413
    %1540 = vmatprep.subr.mxu0 %v1410
    %1541 = vmatpush1.msra.mxu0 %v1409
    %1542 = vmatprep.subr.mxu0 %v1406
    %1543 = vmatpush1.msra.mxu0 %v1405
    %1544 = vmatprep.subr.mxu0 %v1402
    %1545 = vmatpush1.msra.mxu0 %v1401
    %1546 = vmatprep.subr.mxu0 0.0
    %1547 = vmatpush2.msra.mxu0 0.0
    %1548 = vmatprep.subr.mxu0 0.0
    %1549 = vmatpush2.msra.mxu0 0.0
    %1550 = vmatprep.subr.mxu0 0.0
    %1551 = vmatpush2.msra.mxu0 0.0
    %1552 = vmatprep.subr.mxu0 0.0
    %1553 = vmatpush2.msra.mxu0 0.0
    %1554 = vmatprep.subr.mxu0 0.0
    %1555 = vmatpush2.msra.mxu0 0.0
    %1556 = vmatprep.subr.mxu0 0.0
    %1557 = vmatpush2.msra.mxu0 0.0
    %1558 = vmatprep.subr.mxu0 0.0
    %1559 = vmatpush2.msra.mxu0 0.0
    %1560 = vmatprep.subr.mxu0 0.0
    %1561 = vmatpush2.msra.mxu0 0.0
    %1562 = vmatprep.subr.mxu0 0.0
    %1563 = vmatpush2.msra.mxu0 0.0
    %1564 = vmatprep.subr.mxu0 0.0
    %1565 = vmatpush2.msra.mxu0 0.0
    %1566 = vmatprep.subr.mxu0 0.0
    %1567 = vmatpush2.msra.mxu0 0.0
    %1568 = vmatprep.subr.mxu0 0.0
    %1569 = vmatpush2.msra.mxu0 0.0
    %1570 = vmatprep.subr.mxu0 0.0
    %1571 = vmatpush2.msra.mxu0 0.0
    %1572 = vmatprep.subr.mxu0 0.0
    %1573 = vmatpush2.msra.mxu0 0.0
    %1574 = vmatprep.subr.mxu0 0.0
    %1575 = vmatpush2.msra.mxu0 0.0
    %1576 = vmatprep.subr.mxu0 0.0
    %1577 = vmatpush2.msra.mxu0 0.0
    %1578 = vmatprep.mubr.f32.mxu0 0.0
    %1579 = vmatmul.mubr.f32.gmra.mxu0 %v1432
    %v1580 = vpop.f32.mrf.mxu0
    %v1581 = vadd.f32 0.0, %v1580
    %v1582 = vpop.f32.mrf.mxu0
    %v1583 = vadd.f32 0.0, %v1582
    %1584 = vmatprep.mubr.f32.mxu0 0.0
    %1585 = vmatmul.mubr.f32.gmra.mxu0 %v1435
    %v1586 = vpop.f32.mrf.mxu0
    %v1587 = vadd.f32 0.0, %v1586
    %v1588 = vpop.f32.mrf.mxu0
    %v1589 = vadd.f32 0.0, %v1588
    %1590 = vdwg.mxu0
    %v1591 = vadd.f32 %v1312, %v1504
    %v1592 = vadd.f32 %v1314, %v1506
    %v1593 = vadd.f32 %v1389, %v1581
    %v1594 = vadd.f32 %v1391, %v1583
    %v1595 = vadd.f32 %v1318, %v1510
    %v1596 = vadd.f32 %v1320, %v1512
    %v1597 = vadd.f32 %v1395, %v1587
    %v1598 = vadd.f32 %v1397, %v1589
    %v1599 = vld [vmem:[%s6] sm:$0xf]
    %v1601 = vlaneseq
    %v1602 = vshrl.u32 %v1601, 7
    %v1603 = vsub.s32 0, %v1602
    %v1604 = vrot.slane %v1599, %v1603
    %v1605 = vlaneseq
    %v1606 = vshrl.u32 %v1605, 7
    %v1607 = vsub.s32 1, %v1606
    %v1608 = vrot.slane %v1599, %v1607
    %v1609 = vlaneseq
    %v1610 = vshrl.u32 %v1609, 7
    %v1611 = vsub.s32 2, %v1610
    %v1612 = vrot.slane %v1599, %v1611
    %v1613 = vlaneseq
    %v1614 = vshrl.u32 %v1613, 7
    %v1615 = vsub.s32 3, %v1614
    %v1616 = vrot.slane %v1599, %v1615
    %v1621 = vadd.f32 %v1591, %v1604
    %v1622 = vadd.f32 %v1592, %v1608
    %v1623 = vadd.f32 %v1593, %v1612
    %v1624 = vadd.f32 %v1594, %v1616
    %v1625 = vadd.f32 %v1595, %v1604
    %v1626 = vadd.f32 %v1596, %v1608
    %v1627 = vadd.f32 %v1597, %v1612
    %v1628 = vadd.f32 %v1598, %v1616
    %s1629 = scalar_lea.vmem %s7, 64
    %1630 = vst [vmem:[%s1629] sm:$0xff] %v1621
    %1631 = vst [vmem:[%s1629 + $0x8] sm:$0xff] %v1622
    %1632 = vst [vmem:[%s1629 + $0x10] sm:$0xff] %v1623
    %1633 = vst [vmem:[%s1629 + $0x18] sm:$0xff] %v1624
    %1634 = vst [vmem:[%s1629 + $0x20] sm:$0xff] %v1625
    %1635 = vst [vmem:[%s1629 + $0x28] sm:$0xff] %v1626
    %1636 = vst [vmem:[%s1629 + $0x30] sm:$0xff] %v1627
    %1637 = vst [vmem:[%s1629 + $0x38] sm:$0xff] %v1628
    // Predicated region
    $region38: #{odconv_layer1.1} parent=1 // pred_check
      _
    $region39: #{odconv_layer1.1} parent=1 // pred_check_branch
      %1639 = sbr.rel (0) target = $region41
    $region40: #{odconv_layer1.1} parent=1 // pred_region
      _
    $region41: #{odconv_layer1.1} parent=1 // pred_fallthru
      _
    // Predicated region
    $region42: #{odconv_layer1.1} parent=1 // pred_check
      _
    $region43: #{odconv_layer1.1} parent=1 // pred_check_branch
      %1641 = sbr.rel (0) target = $region45
    $region44: #{odconv_layer1.1} parent=1 // pred_region
      _
    $region45: #{odconv_layer1.1} parent=1 // pred_fallthru
      _
    %1642 = vsyncpa [#allocation3], 1
    %1643 = vsyncpa [#allocation5], 1

</llo_original>
